<compile_context>
chip_gen: v7x
topology: tpu7x:2x2x1
jax: 0.10.0
libtpu: 0.0.40
codegen_flags: <defaults>
</compile_context>

<pallas_src>
import jax
import jax.numpy as jnp
import numpy as np
from jax.experimental import pallas as pl
from jax.experimental.pallas import tpu as pltpu

NEG_SLOPE = 0.01  # torch.nn.LeakyReLU default


def _leaky_relu(x):
    return jnp.where(x >= 0, x, NEG_SLOPE * x)


def _dot(a, b):
    return jnp.dot(a, b, preferred_element_type=jnp.float32)


# ---------------------------------------------------------------------------
# Fused forward kernel: everything stays resident in VMEM.
# ---------------------------------------------------------------------------
def _fused_forward_kernel(*refs):
    (a_ref, x_ref,
     wc1, bc1, wc2, bc2,
     e1w1, e1b1, e1w2, e1b2, e1wmu, e1bmu, e1wlv, e1blv,
     e2w1, e2b1, e2w2, e2b2, e2wmu, e2bmu, e2wlv, e2blv,
     fcw_top, fcw_bot, fcb,
     d1w1, d1b1, d1w2, d1b2, d1w3, d1b3,
     d2w1, d2b1, d2w2, d2b2, d2w3, d2b3,
     eps1_ref, eps2_ref,
     mup1_ref, mu1_ref, lv1_ref, mup2_ref, mu2_ref, lv2_ref, z_ref) = refs

    x = x_ref[...]          # (N, 150)
    a = a_ref[...]          # (N, N) normalized adjacency

    # GCNConv: A_hat @ (X @ W) + b.  W is zero-padded to 150 rows so the full
    # X feeds both branches without any in-kernel channel split.
    h1 = _dot(a, _dot(x, wc1[...])) + bc1[...]          # (N, 100)
    h2 = _dot(a, _dot(x, wc2[...])) + bc2[...]          # (N, 50)

    def hidden2(h, w1, b1, w2, b2):
        h = _leaky_relu(_dot(h, w1[...]) + b1[...])
        h = _leaky_relu(_dot(h, w2[...]) + b2[...])
        return h

    # Encoders: Linear -> LeakyReLU -> Linear -> LeakyReLU -> Linear, with the
    # last layer split into mu / log_var column heads.
    e1 = hidden2(h1, e1w1, e1b1, e1w2, e1b2)
    mu1 = _dot(e1, e1wmu[...]) + e1bmu[...]             # (N, 10)
    lv1 = _dot(e1, e1wlv[...]) + e1blv[...]             # (N, 10)
    e2 = hidden2(h2, e2w1, e2b1, e2w2, e2b2)
    mu2 = _dot(e2, e2wmu[...]) + e2bmu[...]             # (N, 10)
    lv2 = _dot(e2, e2wlv[...]) + e2blv[...]             # (N, 10)

    # Reparameterization: z = mu + eps * exp(0.5 * log_var)   (single EUP exp)
    z1 = mu1 + eps1_ref[...] * jnp.exp(0.5 * lv1)
    z2 = mu2 + eps2_ref[...] * jnp.exp(0.5 * lv2)

    # FC(cat(z1, z2)) + ReLU via a row-split weight (no in-kernel concat).
    z = jnp.maximum(
        _dot(z1, fcw_top[...]) + _dot(z2, fcw_bot[...]) + fcb[...], 0.0)

    def decoder(zz, w1, b1, w2, b2, w3, b3):
        h = _leaky_relu(_dot(zz, w1[...]) + b1[...])
        h = _leaky_relu(_dot(h, w2[...]) + b2[...])
        return jax.nn.sigmoid(_dot(h, w3[...]) + b3[...])

    mup1_ref[...] = decoder(z, d1w1, d1b1, d1w2, d1b2, d1w3, d1b3)  # (N, 100)
    mup2_ref[...] = decoder(z, d2w1, d2b1, d2w2, d2b2, d2w3, d2b3)  # (N, 50)
    mu1_ref[...] = mu1
    lv1_ref[...] = lv1
    mu2_ref[...] = mu2
    lv2_ref[...] = lv2
    z_ref[...] = z


def gcn_vae_fused_call(a_hat, x, kparams, eps1, eps2):
    n = x.shape[0]
    inputs = (a_hat, x) + tuple(kparams) + (eps1, eps2)
    out_shape = (
        jax.ShapeDtypeStruct((n, 100), jnp.float32),  # mu_prime1
        jax.ShapeDtypeStruct((n, 10), jnp.float32),   # mu1
        jax.ShapeDtypeStruct((n, 10), jnp.float32),   # log_var1
        jax.ShapeDtypeStruct((n, 50), jnp.float32),   # mu_prime2
        jax.ShapeDtypeStruct((n, 10), jnp.float32),   # mu2
        jax.ShapeDtypeStruct((n, 10), jnp.float32),   # log_var2
        jax.ShapeDtypeStruct((n, 20), jnp.float32),   # z
    )
    return pl.pallas_call(
        _fused_forward_kernel,
        out_shape=out_shape,
        in_specs=[pl.BlockSpec(memory_space=pltpu.MemorySpace.VMEM)
                  for _ in inputs],
        out_specs=tuple(pl.BlockSpec(memory_space=pltpu.MemorySpace.VMEM)
                        for _ in out_shape),
    )(*inputs)


# ---------------------------------------------------------------------------
# Parameters (torch-layout) and one-time repack into the fused-kernel layout.
# ---------------------------------------------------------------------------
def _init_linear(key, fan_in, fan_out, scale=0.1):
    kw, kb = jax.random.split(key)
    w = scale * jax.random.normal(kw, (fan_in, fan_out), jnp.float32)
    b = scale * jax.random.normal(kb, (1, fan_out), jnp.float32)
    return w, b


def init_params(key):
    ks = jax.random.split(key, 15)
    return {
        "conv1": _init_linear(ks[0], 100, 100),
        "conv2": _init_linear(ks[1], 50, 50),
        "enc1": (_init_linear(ks[2], 100, 70),
                 _init_linear(ks[3], 70, 40),
                 _init_linear(ks[4], 40, 20)),
        "enc2": (_init_linear(ks[5], 50, 40),
                 _init_linear(ks[6], 40, 30),
                 _init_linear(ks[7], 30, 20)),
        "fc": _init_linear(ks[8], 20, 20),
        "dec1": (_init_linear(ks[9], 20, 40),
                 _init_linear(ks[10], 40, 70),
                 _init_linear(ks[11], 70, 100)),
        "dec2": (_init_linear(ks[12], 20, 30),
                 _init_linear(ks[13], 30, 40),
                 _init_linear(ks[14], 40, 50)),
    }


def pack_params(params):
    """One-time, out-of-hot-path repack of torch-layout params into the fused
    kernel layout (zero-padded conv blocks, column-split mu/log_var heads,
    row-split FC weight). Mathematically identical to the torch module."""
    wc1, bc1 = params["conv1"]           # (100,100), (1,100)
    wc2, bc2 = params["conv2"]           # (50,50),   (1,50)
    wc1p = jnp.zeros((150, 100), jnp.float32).at[:100, :].set(wc1)
    wc2p = jnp.zeros((150, 50), jnp.float32).at[100:, :].set(wc2)

    (e1w1, e1b1), (e1w2, e1b2), (e1w3, e1b3) = params["enc1"]
    (e2w1, e2b1), (e2w2, e2b2), (e2w3, e2b3) = params["enc2"]
    wfc, bfc = params["fc"]
    (d1w1, d1b1), (d1w2, d1b2), (d1w3, d1b3) = params["dec1"]
    (d2w1, d2b1), (d2w2, d2b2), (d2w3, d2b3) = params["dec2"]

    return (
        wc1p, bc1, wc2p, bc2,
        e1w1, e1b1, e1w2, e1b2,
        e1w3[:, :10], e1b3[:, :10], e1w3[:, 10:], e1b3[:, 10:],
        e2w1, e2b1, e2w2, e2b2,
        e2w3[:, :10], e2b3[:, :10], e2w3[:, 10:], e2b3[:, 10:],
        wfc[:10, :], wfc[10:, :], bfc,
        d1w1, d1b1, d1w2, d1b2, d1w3, d1b3,
        d2w1, d2b1, d2w2, d2b2, d2w3, d2b3,
    )


def build_normalized_adjacency(edge_index, num_nodes):
    # Dense A_hat = D^{-1/2} (A + I_missing) D^{-1/2}, matching PyG GCNConv
    # defaults; self-loops are only added where not already present.
    src, dst = edge_index[0], edge_index[1]
    a = jnp.zeros((num_nodes, num_nodes), jnp.float32)
    a = a.at[dst, src].add(1.0)                       # message flows src -> dst
    idx = jnp.arange(num_nodes)
    diag = a[idx, idx]
    a = a.at[idx, idx].set(jnp.where(diag > 0, diag, 1.0))
    deg = a.sum(axis=1)
    dinv = jnp.where(deg > 0, 1.0 / jnp.sqrt(deg), 0.0)
    return dinv[:, None] * a * dinv[None, :]


# ---------------------------------------------------------------------------
# Full forward pass (mirrors GCN_VAE.forward with latent split 10/10)
# ---------------------------------------------------------------------------
@jax.jit
def gcn_vae_forward(x, a_hat, kparams, key):
    n = x.shape[0]
    k1, k2 = jax.random.split(key)
    eps1 = jax.random.normal(k1, (n, 10), jnp.float32)
    eps2 = jax.random.normal(k2, (n, 10), jnp.float32)
    mup1, mu1, lv1, mup2, mu2, lv2, z = gcn_vae_fused_call(
        a_hat, x, kparams, eps1, eps2)
    return (mup1, mu1, lv1), (mup2, mu2, lv2), z


if __name__ == "__main__":
    N = 8  # number of graph nodes
    key = jax.random.PRNGKey(0)
    k_x, k_p, k_eps = jax.random.split(key, 3)

    # Node features [N, 150]: first 100 -> conv1 branch, last 50 -> conv2.
    x = jax.random.normal(k_x, (N, 150), jnp.float32)

    # Small symmetric ring graph: edge_index [2, 2N]
    src = np.concatenate([np.arange(N), (np.arange(N) + 1) % N])
    dst = np.concatenate([(np.arange(N) + 1) % N, np.arange(N)])
    edge_index = jnp.asarray(np.stack([src, dst]), jnp.int32)

    a_hat = build_normalized_adjacency(edge_index, N)
    params = init_params(k_p)
    kparams = pack_params(params)   # one-time repack, outside the hot path

    r1, r2, z = gcn_vae_forward(x, a_hat, kparams, k_eps)
    jax.block_until_ready(z)

    mu_prime1, mu1, log_var1 = r1
    mu_prime2, mu2, log_var2 = r2
    assert mu_prime1.shape == (N, 100) and mu1.shape == (N, 10) and log_var1.shape == (N, 10)
    assert mu_prime2.shape == (N, 50) and mu2.shape == (N, 10) and log_var2.shape == (N, 10)
    assert z.shape == (N, 20)
    assert all(bool(jnp.all(jnp.isfinite(t)))
               for t in (mu_prime1, mu_prime2, mu1, mu2, log_var1, log_var2, z))

    print("KERNEL_OK")
</pallas_src>

<mosaic_0001>
module attributes {stable_mosaic.version = 11 : i64} {
  func.func @_fused_forward_kernel(%arg0: memref<8x8xf32, #tpu.memory_space<vmem>>, %arg1: memref<8x150xf32, #tpu.memory_space<vmem>>, %arg2: memref<150x100xf32, #tpu.memory_space<vmem>>, %arg3: memref<1x100xf32, #tpu.memory_space<vmem>>, %arg4: memref<150x50xf32, #tpu.memory_space<vmem>>, %arg5: memref<1x50xf32, #tpu.memory_space<vmem>>, %arg6: memref<100x70xf32, #tpu.memory_space<vmem>>, %arg7: memref<1x70xf32, #tpu.memory_space<vmem>>, %arg8: memref<70x40xf32, #tpu.memory_space<vmem>>, %arg9: memref<1x40xf32, #tpu.memory_space<vmem>>, %arg10: memref<40x10xf32, #tpu.memory_space<vmem>>, %arg11: memref<1x10xf32, #tpu.memory_space<vmem>>, %arg12: memref<40x10xf32, #tpu.memory_space<vmem>>, %arg13: memref<1x10xf32, #tpu.memory_space<vmem>>, %arg14: memref<50x40xf32, #tpu.memory_space<vmem>>, %arg15: memref<1x40xf32, #tpu.memory_space<vmem>>, %arg16: memref<40x30xf32, #tpu.memory_space<vmem>>, %arg17: memref<1x30xf32, #tpu.memory_space<vmem>>, %arg18: memref<30x10xf32, #tpu.memory_space<vmem>>, %arg19: memref<1x10xf32, #tpu.memory_space<vmem>>, %arg20: memref<30x10xf32, #tpu.memory_space<vmem>>, %arg21: memref<1x10xf32, #tpu.memory_space<vmem>>, %arg22: memref<10x20xf32, #tpu.memory_space<vmem>>, %arg23: memref<10x20xf32, #tpu.memory_space<vmem>>, %arg24: memref<1x20xf32, #tpu.memory_space<vmem>>, %arg25: memref<20x40xf32, #tpu.memory_space<vmem>>, %arg26: memref<1x40xf32, #tpu.memory_space<vmem>>, %arg27: memref<40x70xf32, #tpu.memory_space<vmem>>, %arg28: memref<1x70xf32, #tpu.memory_space<vmem>>, %arg29: memref<70x100xf32, #tpu.memory_space<vmem>>, %arg30: memref<1x100xf32, #tpu.memory_space<vmem>>, %arg31: memref<20x30xf32, #tpu.memory_space<vmem>>, %arg32: memref<1x30xf32, #tpu.memory_space<vmem>>, %arg33: memref<30x40xf32, #tpu.memory_space<vmem>>, %arg34: memref<1x40xf32, #tpu.memory_space<vmem>>, %arg35: memref<40x50xf32, #tpu.memory_space<vmem>>, %arg36: memref<1x50xf32, #tpu.memory_space<vmem>>, %arg37: memref<8x10xf32, #tpu.memory_space<vmem>>, %arg38: memref<8x10xf32, #tpu.memory_space<vmem>>, %arg39: memref<8x100xf32, #tpu.memory_space<vmem>>, %arg40: memref<8x10xf32, #tpu.memory_space<vmem>>, %arg41: memref<8x10xf32, #tpu.memory_space<vmem>>, %arg42: memref<8x50xf32, #tpu.memory_space<vmem>>, %arg43: memref<8x10xf32, #tpu.memory_space<vmem>>, %arg44: memref<8x10xf32, #tpu.memory_space<vmem>>, %arg45: memref<8x20xf32, #tpu.memory_space<vmem>>) attributes {dimension_semantics = [], scalar_prefetch = 0 : i64, scratch_operands = 0 : i64, tpu.core_type = #tpu.core_type<tc>} {
    %c0 = arith.constant 0 : index
    %c0_0 = arith.constant 0 : index
    %0 = vector.load %arg1[%c0, %c0_0] : memref<8x150xf32, #tpu.memory_space<vmem>>, vector<8x150xf32>
    %c0_1 = arith.constant 0 : index
    %c0_2 = arith.constant 0 : index
    %1 = vector.load %arg0[%c0_1, %c0_2] : memref<8x8xf32, #tpu.memory_space<vmem>>, vector<8x8xf32>
    %c0_3 = arith.constant 0 : index
    %c0_4 = arith.constant 0 : index
    %2 = vector.load %arg2[%c0_3, %c0_4] : memref<150x100xf32, #tpu.memory_space<vmem>>, vector<150x100xf32>
    %cst = arith.constant dense<0.000000e+00> : vector<8x100xf32>
    %3 = tpu.matmul %0, %2, %cst {dimension_numbers = #tpu.dot_dimension_numbers<[1], [0], [0], [1], [0, 0, 1, 1], [], []>} : vector<8x150xf32>, vector<150x100xf32>, vector<8x100xf32> -> vector<8x100xf32>
    %cst_5 = arith.constant dense<0.000000e+00> : vector<8x100xf32>
    %4 = tpu.matmul %1, %3, %cst_5 {dimension_numbers = #tpu.dot_dimension_numbers<[1], [0], [0], [1], [0, 0, 1, 1], [], []>} : vector<8x8xf32>, vector<8x100xf32>, vector<8x100xf32> -> vector<8x100xf32>
    %c0_6 = arith.constant 0 : index
    %c0_7 = arith.constant 0 : index
    %5 = vector.load %arg3[%c0_6, %c0_7] : memref<1x100xf32, #tpu.memory_space<vmem>>, vector<1x100xf32>
    %6 = vector.broadcast %5 : vector<1x100xf32> to vector<8x100xf32>
    %7 = arith.addf %4, %6 : vector<8x100xf32>
    %c0_8 = arith.constant 0 : index
    %c0_9 = arith.constant 0 : index
    %8 = vector.load %arg4[%c0_8, %c0_9] : memref<150x50xf32, #tpu.memory_space<vmem>>, vector<150x50xf32>
    %cst_10 = arith.constant dense<0.000000e+00> : vector<8x50xf32>
    %9 = tpu.matmul %0, %8, %cst_10 {dimension_numbers = #tpu.dot_dimension_numbers<[1], [0], [0], [1], [0, 0, 1, 1], [], []>} : vector<8x150xf32>, vector<150x50xf32>, vector<8x50xf32> -> vector<8x50xf32>
    %cst_11 = arith.constant dense<0.000000e+00> : vector<8x50xf32>
    %10 = tpu.matmul %1, %9, %cst_11 {dimension_numbers = #tpu.dot_dimension_numbers<[1], [0], [0], [1], [0, 0, 1, 1], [], []>} : vector<8x8xf32>, vector<8x50xf32>, vector<8x50xf32> -> vector<8x50xf32>
    %c0_12 = arith.constant 0 : index
    %c0_13 = arith.constant 0 : index
    %11 = vector.load %arg5[%c0_12, %c0_13] : memref<1x50xf32, #tpu.memory_space<vmem>>, vector<1x50xf32>
    %12 = vector.broadcast %11 : vector<1x50xf32> to vector<8x50xf32>
    %13 = arith.addf %10, %12 : vector<8x50xf32>
    %c0_14 = arith.constant 0 : index
    %c0_15 = arith.constant 0 : index
    %14 = vector.load %arg6[%c0_14, %c0_15] : memref<100x70xf32, #tpu.memory_space<vmem>>, vector<100x70xf32>
    %cst_16 = arith.constant dense<0.000000e+00> : vector<8x70xf32>
    %15 = tpu.matmul %7, %14, %cst_16 {dimension_numbers = #tpu.dot_dimension_numbers<[1], [0], [0], [1], [0, 0, 1, 1], [], []>} : vector<8x100xf32>, vector<100x70xf32>, vector<8x70xf32> -> vector<8x70xf32>
    %c0_17 = arith.constant 0 : index
    %c0_18 = arith.constant 0 : index
    %16 = vector.load %arg7[%c0_17, %c0_18] : memref<1x70xf32, #tpu.memory_space<vmem>>, vector<1x70xf32>
    %17 = vector.broadcast %16 : vector<1x70xf32> to vector<8x70xf32>
    %18 = arith.addf %15, %17 : vector<8x70xf32>
    %cst_19 = arith.constant 0.000000e+00 : f32
    %19 = vector.broadcast %cst_19 : f32 to vector<8x70xf32>
    %20 = arith.cmpf oge, %18, %19 : vector<8x70xf32>
    %cst_20 = arith.constant 0.00999999977 : f32
    %21 = vector.broadcast %cst_20 : f32 to vector<8x70xf32>
    %22 = arith.mulf %21, %18 : vector<8x70xf32>
    %23 = arith.select %20, %18, %22 : vector<8x70xi1>, vector<8x70xf32>
    %c0_21 = arith.constant 0 : index
    %c0_22 = arith.constant 0 : index
    %24 = vector.load %arg8[%c0_21, %c0_22] : memref<70x40xf32, #tpu.memory_space<vmem>>, vector<70x40xf32>
    %cst_23 = arith.constant dense<0.000000e+00> : vector<8x40xf32>
    %25 = tpu.matmul %23, %24, %cst_23 {dimension_numbers = #tpu.dot_dimension_numbers<[1], [0], [0], [1], [0, 0, 1, 1], [], []>} : vector<8x70xf32>, vector<70x40xf32>, vector<8x40xf32> -> vector<8x40xf32>
    %c0_24 = arith.constant 0 : index
    %c0_25 = arith.constant 0 : index
    %26 = vector.load %arg9[%c0_24, %c0_25] : memref<1x40xf32, #tpu.memory_space<vmem>>, vector<1x40xf32>
    %27 = vector.broadcast %26 : vector<1x40xf32> to vector<8x40xf32>
    %28 = arith.addf %25, %27 : vector<8x40xf32>
    %cst_26 = arith.constant 0.000000e+00 : f32
    %29 = vector.broadcast %cst_26 : f32 to vector<8x40xf32>
    %30 = arith.cmpf oge, %28, %29 : vector<8x40xf32>
    %cst_27 = arith.constant 0.00999999977 : f32
    %31 = vector.broadcast %cst_27 : f32 to vector<8x40xf32>
    %32 = arith.mulf %31, %28 : vector<8x40xf32>
    %33 = arith.select %30, %28, %32 : vector<8x40xi1>, vector<8x40xf32>
    %c0_28 = arith.constant 0 : index
    %c0_29 = arith.constant 0 : index
    %34 = vector.load %arg10[%c0_28, %c0_29] : memref<40x10xf32, #tpu.memory_space<vmem>>, vector<40x10xf32>
    %cst_30 = arith.constant dense<0.000000e+00> : vector<8x10xf32>
    %35 = tpu.matmul %33, %34, %cst_30 {dimension_numbers = #tpu.dot_dimension_numbers<[1], [0], [0], [1], [0, 0, 1, 1], [], []>} : vector<8x40xf32>, vector<40x10xf32>, vector<8x10xf32> -> vector<8x10xf32>
    %c0_31 = arith.constant 0 : index
    %c0_32 = arith.constant 0 : index
    %36 = vector.load %arg11[%c0_31, %c0_32] : memref<1x10xf32, #tpu.memory_space<vmem>>, vector<1x10xf32>
    %37 = vector.broadcast %36 : vector<1x10xf32> to vector<8x10xf32>
    %38 = arith.addf %35, %37 : vector<8x10xf32>
    %c0_33 = arith.constant 0 : index
    %c0_34 = arith.constant 0 : index
    %39 = vector.load %arg12[%c0_33, %c0_34] : memref<40x10xf32, #tpu.memory_space<vmem>>, vector<40x10xf32>
    %cst_35 = arith.constant dense<0.000000e+00> : vector<8x10xf32>
    %40 = tpu.matmul %33, %39, %cst_35 {dimension_numbers = #tpu.dot_dimension_numbers<[1], [0], [0], [1], [0, 0, 1, 1], [], []>} : vector<8x40xf32>, vector<40x10xf32>, vector<8x10xf32> -> vector<8x10xf32>
    %c0_36 = arith.constant 0 : index
    %c0_37 = arith.constant 0 : index
    %41 = vector.load %arg13[%c0_36, %c0_37] : memref<1x10xf32, #tpu.memory_space<vmem>>, vector<1x10xf32>
    %42 = vector.broadcast %41 : vector<1x10xf32> to vector<8x10xf32>
    %43 = arith.addf %40, %42 : vector<8x10xf32>
    %c0_38 = arith.constant 0 : index
    %c0_39 = arith.constant 0 : index
    %44 = vector.load %arg14[%c0_38, %c0_39] : memref<50x40xf32, #tpu.memory_space<vmem>>, vector<50x40xf32>
    %cst_40 = arith.constant dense<0.000000e+00> : vector<8x40xf32>
    %45 = tpu.matmul %13, %44, %cst_40 {dimension_numbers = #tpu.dot_dimension_numbers<[1], [0], [0], [1], [0, 0, 1, 1], [], []>} : vector<8x50xf32>, vector<50x40xf32>, vector<8x40xf32> -> vector<8x40xf32>
    %c0_41 = arith.constant 0 : index
    %c0_42 = arith.constant 0 : index
    %46 = vector.load %arg15[%c0_41, %c0_42] : memref<1x40xf32, #tpu.memory_space<vmem>>, vector<1x40xf32>
    %47 = vector.broadcast %46 : vector<1x40xf32> to vector<8x40xf32>
    %48 = arith.addf %45, %47 : vector<8x40xf32>
    %cst_43 = arith.constant 0.000000e+00 : f32
    %49 = vector.broadcast %cst_43 : f32 to vector<8x40xf32>
    %50 = arith.cmpf oge, %48, %49 : vector<8x40xf32>
    %cst_44 = arith.constant 0.00999999977 : f32
    %51 = vector.broadcast %cst_44 : f32 to vector<8x40xf32>
    %52 = arith.mulf %51, %48 : vector<8x40xf32>
    %53 = arith.select %50, %48, %52 : vector<8x40xi1>, vector<8x40xf32>
    %c0_45 = arith.constant 0 : index
    %c0_46 = arith.constant 0 : index
    %54 = vector.load %arg16[%c0_45, %c0_46] : memref<40x30xf32, #tpu.memory_space<vmem>>, vector<40x30xf32>
    %cst_47 = arith.constant dense<0.000000e+00> : vector<8x30xf32>
    %55 = tpu.matmul %53, %54, %cst_47 {dimension_numbers = #tpu.dot_dimension_numbers<[1], [0], [0], [1], [0, 0, 1, 1], [], []>} : vector<8x40xf32>, vector<40x30xf32>, vector<8x30xf32> -> vector<8x30xf32>
    %c0_48 = arith.constant 0 : index
    %c0_49 = arith.constant 0 : index
    %56 = vector.load %arg17[%c0_48, %c0_49] : memref<1x30xf32, #tpu.memory_space<vmem>>, vector<1x30xf32>
    %57 = vector.broadcast %56 : vector<1x30xf32> to vector<8x30xf32>
    %58 = arith.addf %55, %57 : vector<8x30xf32>
    %cst_50 = arith.constant 0.000000e+00 : f32
    %59 = vector.broadcast %cst_50 : f32 to vector<8x30xf32>
    %60 = arith.cmpf oge, %58, %59 : vector<8x30xf32>
    %cst_51 = arith.constant 0.00999999977 : f32
    %61 = vector.broadcast %cst_51 : f32 to vector<8x30xf32>
    %62 = arith.mulf %61, %58 : vector<8x30xf32>
    %63 = arith.select %60, %58, %62 : vector<8x30xi1>, vector<8x30xf32>
    %c0_52 = arith.constant 0 : index
    %c0_53 = arith.constant 0 : index
    %64 = vector.load %arg18[%c0_52, %c0_53] : memref<30x10xf32, #tpu.memory_space<vmem>>, vector<30x10xf32>
    %cst_54 = arith.constant dense<0.000000e+00> : vector<8x10xf32>
    %65 = tpu.matmul %63, %64, %cst_54 {dimension_numbers = #tpu.dot_dimension_numbers<[1], [0], [0], [1], [0, 0, 1, 1], [], []>} : vector<8x30xf32>, vector<30x10xf32>, vector<8x10xf32> -> vector<8x10xf32>
    %c0_55 = arith.constant 0 : index
    %c0_56 = arith.constant 0 : index
    %66 = vector.load %arg19[%c0_55, %c0_56] : memref<1x10xf32, #tpu.memory_space<vmem>>, vector<1x10xf32>
    %67 = vector.broadcast %66 : vector<1x10xf32> to vector<8x10xf32>
    %68 = arith.addf %65, %67 : vector<8x10xf32>
    %c0_57 = arith.constant 0 : index
    %c0_58 = arith.constant 0 : index
    %69 = vector.load %arg20[%c0_57, %c0_58] : memref<30x10xf32, #tpu.memory_space<vmem>>, vector<30x10xf32>
    %cst_59 = arith.constant dense<0.000000e+00> : vector<8x10xf32>
    %70 = tpu.matmul %63, %69, %cst_59 {dimension_numbers = #tpu.dot_dimension_numbers<[1], [0], [0], [1], [0, 0, 1, 1], [], []>} : vector<8x30xf32>, vector<30x10xf32>, vector<8x10xf32> -> vector<8x10xf32>
    %c0_60 = arith.constant 0 : index
    %c0_61 = arith.constant 0 : index
    %71 = vector.load %arg21[%c0_60, %c0_61] : memref<1x10xf32, #tpu.memory_space<vmem>>, vector<1x10xf32>
    %72 = vector.broadcast %71 : vector<1x10xf32> to vector<8x10xf32>
    %73 = arith.addf %70, %72 : vector<8x10xf32>
    %c0_62 = arith.constant 0 : index
    %c0_63 = arith.constant 0 : index
    %74 = vector.load %arg37[%c0_62, %c0_63] : memref<8x10xf32, #tpu.memory_space<vmem>>, vector<8x10xf32>
    %cst_64 = arith.constant 5.000000e-01 : f32
    %75 = vector.broadcast %cst_64 : f32 to vector<8x10xf32>
    %76 = arith.mulf %75, %43 : vector<8x10xf32>
    %77 = math.exp %76 : vector<8x10xf32>
    %78 = arith.mulf %74, %77 : vector<8x10xf32>
    %79 = arith.addf %38, %78 : vector<8x10xf32>
    %c0_65 = arith.constant 0 : index
    %c0_66 = arith.constant 0 : index
    %80 = vector.load %arg38[%c0_65, %c0_66] : memref<8x10xf32, #tpu.memory_space<vmem>>, vector<8x10xf32>
    %cst_67 = arith.constant 5.000000e-01 : f32
    %81 = vector.broadcast %cst_67 : f32 to vector<8x10xf32>
    %82 = arith.mulf %81, %73 : vector<8x10xf32>
    %83 = math.exp %82 : vector<8x10xf32>
    %84 = arith.mulf %80, %83 : vector<8x10xf32>
    %85 = arith.addf %68, %84 : vector<8x10xf32>
    %c0_68 = arith.constant 0 : index
    %c0_69 = arith.constant 0 : index
    %86 = vector.load %arg22[%c0_68, %c0_69] : memref<10x20xf32, #tpu.memory_space<vmem>>, vector<10x20xf32>
    %cst_70 = arith.constant dense<0.000000e+00> : vector<8x20xf32>
    %87 = tpu.matmul %79, %86, %cst_70 {dimension_numbers = #tpu.dot_dimension_numbers<[1], [0], [0], [1], [0, 0, 1, 1], [], []>} : vector<8x10xf32>, vector<10x20xf32>, vector<8x20xf32> -> vector<8x20xf32>
    %c0_71 = arith.constant 0 : index
    %c0_72 = arith.constant 0 : index
    %88 = vector.load %arg23[%c0_71, %c0_72] : memref<10x20xf32, #tpu.memory_space<vmem>>, vector<10x20xf32>
    %cst_73 = arith.constant dense<0.000000e+00> : vector<8x20xf32>
    %89 = tpu.matmul %85, %88, %cst_73 {dimension_numbers = #tpu.dot_dimension_numbers<[1], [0], [0], [1], [0, 0, 1, 1], [], []>} : vector<8x10xf32>, vector<10x20xf32>, vector<8x20xf32> -> vector<8x20xf32>
    %90 = arith.addf %87, %89 : vector<8x20xf32>
    %c0_74 = arith.constant 0 : index
    %c0_75 = arith.constant 0 : index
    %91 = vector.load %arg24[%c0_74, %c0_75] : memref<1x20xf32, #tpu.memory_space<vmem>>, vector<1x20xf32>
    %92 = vector.broadcast %91 : vector<1x20xf32> to vector<8x20xf32>
    %93 = arith.addf %90, %92 : vector<8x20xf32>
    %cst_76 = arith.constant 0.000000e+00 : f32
    %94 = vector.broadcast %cst_76 : f32 to vector<8x20xf32>
    %95 = arith.maximumf %93, %94 : vector<8x20xf32>
    %c0_77 = arith.constant 0 : index
    %c0_78 = arith.constant 0 : index
    %96 = vector.load %arg25[%c0_77, %c0_78] : memref<20x40xf32, #tpu.memory_space<vmem>>, vector<20x40xf32>
    %cst_79 = arith.constant dense<0.000000e+00> : vector<8x40xf32>
    %97 = tpu.matmul %95, %96, %cst_79 {dimension_numbers = #tpu.dot_dimension_numbers<[1], [0], [0], [1], [0, 0, 1, 1], [], []>} : vector<8x20xf32>, vector<20x40xf32>, vector<8x40xf32> -> vector<8x40xf32>
    %c0_80 = arith.constant 0 : index
    %c0_81 = arith.constant 0 : index
    %98 = vector.load %arg26[%c0_80, %c0_81] : memref<1x40xf32, #tpu.memory_space<vmem>>, vector<1x40xf32>
    %99 = vector.broadcast %98 : vector<1x40xf32> to vector<8x40xf32>
    %100 = arith.addf %97, %99 : vector<8x40xf32>
    %cst_82 = arith.constant 0.000000e+00 : f32
    %101 = vector.broadcast %cst_82 : f32 to vector<8x40xf32>
    %102 = arith.cmpf oge, %100, %101 : vector<8x40xf32>
    %cst_83 = arith.constant 0.00999999977 : f32
    %103 = vector.broadcast %cst_83 : f32 to vector<8x40xf32>
    %104 = arith.mulf %103, %100 : vector<8x40xf32>
    %105 = arith.select %102, %100, %104 : vector<8x40xi1>, vector<8x40xf32>
    %c0_84 = arith.constant 0 : index
    %c0_85 = arith.constant 0 : index
    %106 = vector.load %arg27[%c0_84, %c0_85] : memref<40x70xf32, #tpu.memory_space<vmem>>, vector<40x70xf32>
    %cst_86 = arith.constant dense<0.000000e+00> : vector<8x70xf32>
    %107 = tpu.matmul %105, %106, %cst_86 {dimension_numbers = #tpu.dot_dimension_numbers<[1], [0], [0], [1], [0, 0, 1, 1], [], []>} : vector<8x40xf32>, vector<40x70xf32>, vector<8x70xf32> -> vector<8x70xf32>
    %c0_87 = arith.constant 0 : index
    %c0_88 = arith.constant 0 : index
    %108 = vector.load %arg28[%c0_87, %c0_88] : memref<1x70xf32, #tpu.memory_space<vmem>>, vector<1x70xf32>
    %109 = vector.broadcast %108 : vector<1x70xf32> to vector<8x70xf32>
    %110 = arith.addf %107, %109 : vector<8x70xf32>
    %cst_89 = arith.constant 0.000000e+00 : f32
    %111 = vector.broadcast %cst_89 : f32 to vector<8x70xf32>
    %112 = arith.cmpf oge, %110, %111 : vector<8x70xf32>
    %cst_90 = arith.constant 0.00999999977 : f32
    %113 = vector.broadcast %cst_90 : f32 to vector<8x70xf32>
    %114 = arith.mulf %113, %110 : vector<8x70xf32>
    %115 = arith.select %112, %110, %114 : vector<8x70xi1>, vector<8x70xf32>
    %c0_91 = arith.constant 0 : index
    %c0_92 = arith.constant 0 : index
    %116 = vector.load %arg29[%c0_91, %c0_92] : memref<70x100xf32, #tpu.memory_space<vmem>>, vector<70x100xf32>
    %cst_93 = arith.constant dense<0.000000e+00> : vector<8x100xf32>
    %117 = tpu.matmul %115, %116, %cst_93 {dimension_numbers = #tpu.dot_dimension_numbers<[1], [0], [0], [1], [0, 0, 1, 1], [], []>} : vector<8x70xf32>, vector<70x100xf32>, vector<8x100xf32> -> vector<8x100xf32>
    %c0_94 = arith.constant 0 : index
    %c0_95 = arith.constant 0 : index
    %118 = vector.load %arg30[%c0_94, %c0_95] : memref<1x100xf32, #tpu.memory_space<vmem>>, vector<1x100xf32>
    %119 = vector.broadcast %118 : vector<1x100xf32> to vector<8x100xf32>
    %120 = arith.addf %117, %119 : vector<8x100xf32>
    %121 = arith.negf %120 : vector<8x100xf32>
    %122 = math.exp %121 : vector<8x100xf32>
    %cst_96 = arith.constant 1.000000e+00 : f32
    %123 = vector.broadcast %cst_96 : f32 to vector<8x100xf32>
    %124 = arith.addf %123, %122 : vector<8x100xf32>
    %125 = arith.divf %123, %124 : vector<8x100xf32>
    %c0_97 = arith.constant 0 : index
    %c0_98 = arith.constant 0 : index
    %126 = vector.load %arg39[%c0_97, %c0_98] : memref<8x100xf32, #tpu.memory_space<vmem>>, vector<8x100xf32>
    tpu.vector_store %arg39[%c0_97, %c0_98], %125 {strides = array<i32>} : memref<8x100xf32, #tpu.memory_space<vmem>>, vector<8x100xf32>,
    %c0_99 = arith.constant 0 : index
    %c0_100 = arith.constant 0 : index
    %127 = vector.load %arg31[%c0_99, %c0_100] : memref<20x30xf32, #tpu.memory_space<vmem>>, vector<20x30xf32>
    %cst_101 = arith.constant dense<0.000000e+00> : vector<8x30xf32>
    %128 = tpu.matmul %95, %127, %cst_101 {dimension_numbers = #tpu.dot_dimension_numbers<[1], [0], [0], [1], [0, 0, 1, 1], [], []>} : vector<8x20xf32>, vector<20x30xf32>, vector<8x30xf32> -> vector<8x30xf32>
    %c0_102 = arith.constant 0 : index
    %c0_103 = arith.constant 0 : index
    %129 = vector.load %arg32[%c0_102, %c0_103] : memref<1x30xf32, #tpu.memory_space<vmem>>, vector<1x30xf32>
    %130 = vector.broadcast %129 : vector<1x30xf32> to vector<8x30xf32>
    %131 = arith.addf %128, %130 : vector<8x30xf32>
    %cst_104 = arith.constant 0.000000e+00 : f32
    %132 = vector.broadcast %cst_104 : f32 to vector<8x30xf32>
    %133 = arith.cmpf oge, %131, %132 : vector<8x30xf32>
    %cst_105 = arith.constant 0.00999999977 : f32
    %134 = vector.broadcast %cst_105 : f32 to vector<8x30xf32>
    %135 = arith.mulf %134, %131 : vector<8x30xf32>
    %136 = arith.select %133, %131, %135 : vector<8x30xi1>, vector<8x30xf32>
    %c0_106 = arith.constant 0 : index
    %c0_107 = arith.constant 0 : index
    %137 = vector.load %arg33[%c0_106, %c0_107] : memref<30x40xf32, #tpu.memory_space<vmem>>, vector<30x40xf32>
    %cst_108 = arith.constant dense<0.000000e+00> : vector<8x40xf32>
    %138 = tpu.matmul %136, %137, %cst_108 {dimension_numbers = #tpu.dot_dimension_numbers<[1], [0], [0], [1], [0, 0, 1, 1], [], []>} : vector<8x30xf32>, vector<30x40xf32>, vector<8x40xf32> -> vector<8x40xf32>
    %c0_109 = arith.constant 0 : index
    %c0_110 = arith.constant 0 : index
    %139 = vector.load %arg34[%c0_109, %c0_110] : memref<1x40xf32, #tpu.memory_space<vmem>>, vector<1x40xf32>
    %140 = vector.broadcast %139 : vector<1x40xf32> to vector<8x40xf32>
    %141 = arith.addf %138, %140 : vector<8x40xf32>
    %cst_111 = arith.constant 0.000000e+00 : f32
    %142 = vector.broadcast %cst_111 : f32 to vector<8x40xf32>
    %143 = arith.cmpf oge, %141, %142 : vector<8x40xf32>
    %cst_112 = arith.constant 0.00999999977 : f32
    %144 = vector.broadcast %cst_112 : f32 to vector<8x40xf32>
    %145 = arith.mulf %144, %141 : vector<8x40xf32>
    %146 = arith.select %143, %141, %145 : vector<8x40xi1>, vector<8x40xf32>
    %c0_113 = arith.constant 0 : index
    %c0_114 = arith.constant 0 : index
    %147 = vector.load %arg35[%c0_113, %c0_114] : memref<40x50xf32, #tpu.memory_space<vmem>>, vector<40x50xf32>
    %cst_115 = arith.constant dense<0.000000e+00> : vector<8x50xf32>
    %148 = tpu.matmul %146, %147, %cst_115 {dimension_numbers = #tpu.dot_dimension_numbers<[1], [0], [0], [1], [0, 0, 1, 1], [], []>} : vector<8x40xf32>, vector<40x50xf32>, vector<8x50xf32> -> vector<8x50xf32>
    %c0_116 = arith.constant 0 : index
    %c0_117 = arith.constant 0 : index
    %149 = vector.load %arg36[%c0_116, %c0_117] : memref<1x50xf32, #tpu.memory_space<vmem>>, vector<1x50xf32>
    %150 = vector.broadcast %149 : vector<1x50xf32> to vector<8x50xf32>
    %151 = arith.addf %148, %150 : vector<8x50xf32>
    %152 = arith.negf %151 : vector<8x50xf32>
    %153 = math.exp %152 : vector<8x50xf32>
    %cst_118 = arith.constant 1.000000e+00 : f32
    %154 = vector.broadcast %cst_118 : f32 to vector<8x50xf32>
    %155 = arith.addf %154, %153 : vector<8x50xf32>
    %156 = arith.divf %154, %155 : vector<8x50xf32>
    %c0_119 = arith.constant 0 : index
    %c0_120 = arith.constant 0 : index
    %157 = vector.load %arg42[%c0_119, %c0_120] : memref<8x50xf32, #tpu.memory_space<vmem>>, vector<8x50xf32>
    tpu.vector_store %arg42[%c0_119, %c0_120], %156 {strides = array<i32>} : memref<8x50xf32, #tpu.memory_space<vmem>>, vector<8x50xf32>,
    %c0_121 = arith.constant 0 : index
    %c0_122 = arith.constant 0 : index
    %158 = vector.load %arg40[%c0_121, %c0_122] : memref<8x10xf32, #tpu.memory_space<vmem>>, vector<8x10xf32>
    tpu.vector_store %arg40[%c0_121, %c0_122], %38 {strides = array<i32>} : memref<8x10xf32, #tpu.memory_space<vmem>>, vector<8x10xf32>,
    %c0_123 = arith.constant 0 : index
    %c0_124 = arith.constant 0 : index
    %159 = vector.load %arg41[%c0_123, %c0_124] : memref<8x10xf32, #tpu.memory_space<vmem>>, vector<8x10xf32>
    tpu.vector_store %arg41[%c0_123, %c0_124], %43 {strides = array<i32>} : memref<8x10xf32, #tpu.memory_space<vmem>>, vector<8x10xf32>,
    %c0_125 = arith.constant 0 : index
    %c0_126 = arith.constant 0 : index
    %160 = vector.load %arg43[%c0_125, %c0_126] : memref<8x10xf32, #tpu.memory_space<vmem>>, vector<8x10xf32>
    tpu.vector_store %arg43[%c0_125, %c0_126], %68 {strides = array<i32>} : memref<8x10xf32, #tpu.memory_space<vmem>>, vector<8x10xf32>,
    %c0_127 = arith.constant 0 : index
    %c0_128 = arith.constant 0 : index
    %161 = vector.load %arg44[%c0_127, %c0_128] : memref<8x10xf32, #tpu.memory_space<vmem>>, vector<8x10xf32>
    tpu.vector_store %arg44[%c0_127, %c0_128], %73 {strides = array<i32>} : memref<8x10xf32, #tpu.memory_space<vmem>>, vector<8x10xf32>,
    %c0_129 = arith.constant 0 : index
    %c0_130 = arith.constant 0 : index
    %162 = vector.load %arg45[%c0_129, %c0_130] : memref<8x20xf32, #tpu.memory_space<vmem>>, vector<8x20xf32>
    tpu.vector_store %arg45[%c0_129, %c0_130], %95 {strides = array<i32>} : memref<8x20xf32, #tpu.memory_space<vmem>>, vector<8x20xf32>,
    return
  }
}

</mosaic_0001>

<llo_original>
// kernel: gcn_vae_forward.3
$region0: #{gcn_vae_forward.3}
  #allocation0 [shape = 'u32[]', space=smem, size = 0x4, offset = 0x4, fixed_abs, tag = 'smem constant byte address 0x4 - core index']
  #allocation1 [shape = 'u32[144,128]{1,0:T(1,128)}', space=vmem, size = 0x12000, scoped, tag = 'internal scratch']
  %s0 = inlined_call_operand.smem [shape: u32[46], index: -1, kind: input, shape index: {}]
  %s1 = sld [smem:[%s0]]
  %s2 = scalar_lea.smem %s0, 1
  %s3 = sld [smem:[%s2]]
  %s4 = scalar_lea.smem %s0, 2
  %s5 = sld [smem:[%s4]]
  %s6 = scalar_lea.smem %s0, 3
  %s7 = sld [smem:[%s6]]
  %s8 = scalar_lea.smem %s0, 4
  %s9 = sld [smem:[%s8]]
  %s10 = scalar_lea.smem %s0, 5
  %s11 = sld [smem:[%s10]]
  %s12 = scalar_lea.smem %s0, 6
  %s13 = sld [smem:[%s12]]
  %s14 = scalar_lea.smem %s0, 7
  %s15 = sld [smem:[%s14]]
  %s16 = scalar_lea.smem %s0, 8
  %s17 = sld [smem:[%s16]]
  %s18 = scalar_lea.smem %s0, 9
  %s19 = sld [smem:[%s18]]
  %s20 = scalar_lea.smem %s0, 10
  %s21 = sld [smem:[%s20]]
  %s22 = scalar_lea.smem %s0, 11
  %s23 = sld [smem:[%s22]]
  %s24 = scalar_lea.smem %s0, 12
  %s25 = sld [smem:[%s24]]
  %s26 = scalar_lea.smem %s0, 13
  %s27 = sld [smem:[%s26]]
  %s28 = scalar_lea.smem %s0, 14
  %s29 = sld [smem:[%s28]]
  %s30 = scalar_lea.smem %s0, 15
  %s31 = sld [smem:[%s30]]
  %s32 = scalar_lea.smem %s0, 16
  %s33 = sld [smem:[%s32]]
  %s34 = scalar_lea.smem %s0, 17
  %s35 = sld [smem:[%s34]]
  %s36 = scalar_lea.smem %s0, 18
  %s37 = sld [smem:[%s36]]
  %s38 = scalar_lea.smem %s0, 19
  %s39 = sld [smem:[%s38]]
  %s40 = scalar_lea.smem %s0, 20
  %s41 = sld [smem:[%s40]]
  %s42 = scalar_lea.smem %s0, 21
  %s43 = sld [smem:[%s42]]
  %s44 = scalar_lea.smem %s0, 22
  %s45 = sld [smem:[%s44]]
  %s46 = scalar_lea.smem %s0, 23
  %s47 = sld [smem:[%s46]]
  %s48 = scalar_lea.smem %s0, 24
  %s49 = sld [smem:[%s48]]
  %s50 = scalar_lea.smem %s0, 25
  %s51 = sld [smem:[%s50]]
  %s52 = scalar_lea.smem %s0, 26
  %s53 = sld [smem:[%s52]]
  %s54 = scalar_lea.smem %s0, 27
  %s55 = sld [smem:[%s54]]
  %s56 = scalar_lea.smem %s0, 28
  %s57 = sld [smem:[%s56]]
  %s58 = scalar_lea.smem %s0, 29
  %s59 = sld [smem:[%s58]]
  %s60 = scalar_lea.smem %s0, 30
  %s61 = sld [smem:[%s60]]
  %s62 = scalar_lea.smem %s0, 31
  %s63 = sld [smem:[%s62]]
  %s64 = scalar_lea.smem %s0, 32
  %s65 = sld [smem:[%s64]]
  %s66 = scalar_lea.smem %s0, 33
  %s67 = sld [smem:[%s66]]
  %s68 = scalar_lea.smem %s0, 34
  %s69 = sld [smem:[%s68]]
  %s70 = scalar_lea.smem %s0, 35
  %s71 = sld [smem:[%s70]]
  %s72 = scalar_lea.smem %s0, 36
  %s73 = sld [smem:[%s72]]
  %s74 = scalar_lea.smem %s0, 37
  %s75 = sld [smem:[%s74]]
  %s76 = scalar_lea.smem %s0, 38
  %s77 = sld [smem:[%s76]]
  %s78 = scalar_lea.smem %s0, 39
  %s79 = sld [smem:[%s78]]
  %s80 = scalar_lea.smem %s0, 40
  %s81 = sld [smem:[%s80]]
  %s82 = scalar_lea.smem %s0, 41
  %s83 = sld [smem:[%s82]]
  %s84 = scalar_lea.smem %s0, 42
  %s85 = sld [smem:[%s84]]
  %s86 = scalar_lea.smem %s0, 43
  %s87 = sld [smem:[%s86]]
  %s88 = scalar_lea.smem %s0, 44
  %s89 = sld [smem:[%s88]]
  %s90 = scalar_lea.smem %s0, 45
  %s91 = sld [smem:[%s90]]
  %92 = xla_tuple %s79, %s81, %s83, %s85, %s87, %s89, %s91
  %s93 = sld [smem:[#allocation0]]
  $region214: #{gcn_vae_forward.3} parent=0
    _
  %s95 = ssub.s32 1, %s93
  %s96 = scalar_select 0, %s95, %s93
  $region1: #{gcn_vae_forward.3} parent=0
    #allocation2 [shape = 'u8[4096]{0}', space=vmem, size = 0x1000, scoped, tag = 'output window, operand 0, single buffered']
    #allocation3 [shape = 's32[1]{0}', space=sflag, size = 0x4, scoped, tag = 'scoped memory for gcn_vae_forward.3']
    #allocation4 [shape = 'u8[4096]{0}', space=vmem, size = 0x1000, scoped, tag = 'output window, operand 1, single buffered']
    #allocation5 [shape = 's32[1]{0}', space=sflag, size = 0x4, scoped, tag = 'scoped memory for gcn_vae_forward.3']
    #allocation6 [shape = 'u8[4096]{0}', space=vmem, size = 0x1000, scoped, tag = 'output window, operand 2, single buffered']
    #allocation7 [shape = 'u8[4096]{0}', space=vmem, size = 0x1000, scoped, tag = 'output window, operand 3, single buffered']
    #allocation8 [shape = 's32[1]{0}', space=sflag, size = 0x4, scoped, tag = 'scoped memory for gcn_vae_forward.3']
    #allocation9 [shape = 'u8[4096]{0}', space=vmem, size = 0x1000, scoped, tag = 'output window, operand 4, single buffered']
    #allocation10 [shape = 'u8[4096]{0}', space=vmem, size = 0x1000, scoped, tag = 'output window, operand 5, single buffered']
    #allocation11 [shape = 's32[1]{0}', space=sflag, size = 0x4, scoped, tag = 'scoped memory for gcn_vae_forward.3']
    #allocation12 [shape = 'u8[4096]{0}', space=vmem, size = 0x1000, scoped, tag = 'output window, operand 6, single buffered']
    %97 = vsyncpa [#allocation3], 0
    %98 = vsyncpa [#allocation5], 0
    %99 = vsyncpa [#allocation8], 0
    %100 = vsyncpa [#allocation11], 0
    // Predicated region
    $region2: #{gcn_vae_forward.3} parent=1 // pred_check
      _
    $region3: #{gcn_vae_forward.3} parent=1 // pred_check_branch
      %102 = sbr.rel (0) target = $region5
    $region4: #{gcn_vae_forward.3} parent=1 // pred_region
      _
    $region5: #{gcn_vae_forward.3} parent=1 // pred_fallthru
      _
    // Predicated region
    $region6: #{gcn_vae_forward.3} parent=1 // pred_check
      _
    $region7: #{gcn_vae_forward.3} parent=1 // pred_check_branch
      %104 = sbr.rel (0) target = $region9
    $region8: #{gcn_vae_forward.3} parent=1 // pred_region
      _
    $region9: #{gcn_vae_forward.3} parent=1 // pred_fallthru
      _
    // Predicated region
    $region10: #{gcn_vae_forward.3} parent=1 // pred_check
      _
    $region11: #{gcn_vae_forward.3} parent=1 // pred_check_branch
      %106 = sbr.rel (0) target = $region13
    $region12: #{gcn_vae_forward.3} parent=1 // pred_region
      _
    $region13: #{gcn_vae_forward.3} parent=1 // pred_fallthru
      _
    // Predicated region
    $region14: #{gcn_vae_forward.3} parent=1 // pred_check
      _
    $region15: #{gcn_vae_forward.3} parent=1 // pred_check_branch
      %108 = sbr.rel (0) target = $region17
    $region16: #{gcn_vae_forward.3} parent=1 // pred_region
      _
    $region17: #{gcn_vae_forward.3} parent=1 // pred_fallthru
      _
    // Predicated region
    $region18: #{gcn_vae_forward.3} parent=1 // pred_check
      _
    $region19: #{gcn_vae_forward.3} parent=1 // pred_check_branch
      %110 = sbr.rel (0) target = $region21
    $region20: #{gcn_vae_forward.3} parent=1 // pred_region
      _
    $region21: #{gcn_vae_forward.3} parent=1 // pred_fallthru
      _
    // Predicated region
    $region22: #{gcn_vae_forward.3} parent=1 // pred_check
      _
    $region23: #{gcn_vae_forward.3} parent=1 // pred_check_branch
      %112 = sbr.rel (0) target = $region25
    $region24: #{gcn_vae_forward.3} parent=1 // pred_region
      _
    $region25: #{gcn_vae_forward.3} parent=1 // pred_fallthru
      _
    // Predicated region
    $region26: #{gcn_vae_forward.3} parent=1 // pred_check
      _
    $region27: #{gcn_vae_forward.3} parent=1 // pred_check_branch
      %114 = sbr.rel (0) target = $region29
    $region28: #{gcn_vae_forward.3} parent=1 // pred_region
      _
    $region29: #{gcn_vae_forward.3} parent=1 // pred_fallthru
      _
    // Predicated region
    $region30: #{gcn_vae_forward.3} parent=1 // pred_check
      _
    $region31: #{gcn_vae_forward.3} parent=1 // pred_check_branch
      %116 = sbr.rel (0) target = $region33
    $region32: #{gcn_vae_forward.3} parent=1 // pred_region
      _
    $region33: #{gcn_vae_forward.3} parent=1 // pred_fallthru
      _
    // Predicated region
    $region34: #{gcn_vae_forward.3} parent=1 // pred_check
      _
    $region35: #{gcn_vae_forward.3} parent=1 // pred_check_branch
      %118 = sbr.rel (0) target = $region37
    $region36: #{gcn_vae_forward.3} parent=1 // pred_region
      _
    $region37: #{gcn_vae_forward.3} parent=1 // pred_fallthru
      _
    // Predicated region
    $region38: #{gcn_vae_forward.3} parent=1 // pred_check
      _
    $region39: #{gcn_vae_forward.3} parent=1 // pred_check_branch
      %120 = sbr.rel (0) target = $region41
    $region40: #{gcn_vae_forward.3} parent=1 // pred_region
      _
    $region41: #{gcn_vae_forward.3} parent=1 // pred_fallthru
      _
    // Predicated region
    $region42: #{gcn_vae_forward.3} parent=1 // pred_check
      _
    $region43: #{gcn_vae_forward.3} parent=1 // pred_check_branch
      %122 = sbr.rel (0) target = $region45
    $region44: #{gcn_vae_forward.3} parent=1 // pred_region
      _
    $region45: #{gcn_vae_forward.3} parent=1 // pred_fallthru
      _
    // Predicated region
    $region46: #{gcn_vae_forward.3} parent=1 // pred_check
      _
    $region47: #{gcn_vae_forward.3} parent=1 // pred_check_branch
      %124 = sbr.rel (0) target = $region49
    $region48: #{gcn_vae_forward.3} parent=1 // pred_region
      _
    $region49: #{gcn_vae_forward.3} parent=1 // pred_fallthru
      _
    // Predicated region
    $region50: #{gcn_vae_forward.3} parent=1 // pred_check
      _
    $region51: #{gcn_vae_forward.3} parent=1 // pred_check_branch
      %126 = sbr.rel (0) target = $region53
    $region52: #{gcn_vae_forward.3} parent=1 // pred_region
      _
    $region53: #{gcn_vae_forward.3} parent=1 // pred_fallthru
      _
    // Predicated region
    $region54: #{gcn_vae_forward.3} parent=1 // pred_check
      _
    $region55: #{gcn_vae_forward.3} parent=1 // pred_check_branch
      %128 = sbr.rel (0) target = $region57
    $region56: #{gcn_vae_forward.3} parent=1 // pred_region
      _
    $region57: #{gcn_vae_forward.3} parent=1 // pred_fallthru
      _
    // Predicated region
    $region58: #{gcn_vae_forward.3} parent=1 // pred_check
      _
    $region59: #{gcn_vae_forward.3} parent=1 // pred_check_branch
      %130 = sbr.rel (0) target = $region61
    $region60: #{gcn_vae_forward.3} parent=1 // pred_region
      _
    $region61: #{gcn_vae_forward.3} parent=1 // pred_fallthru
      _
    // Predicated region
    $region62: #{gcn_vae_forward.3} parent=1 // pred_check
      _
    $region63: #{gcn_vae_forward.3} parent=1 // pred_check_branch
      %132 = sbr.rel (0) target = $region65
    $region64: #{gcn_vae_forward.3} parent=1 // pred_region
      _
    $region65: #{gcn_vae_forward.3} parent=1 // pred_fallthru
      _
    // Predicated region
    $region66: #{gcn_vae_forward.3} parent=1 // pred_check
      _
    $region67: #{gcn_vae_forward.3} parent=1 // pred_check_branch
      %134 = sbr.rel (0) target = $region69
    $region68: #{gcn_vae_forward.3} parent=1 // pred_region
      _
    $region69: #{gcn_vae_forward.3} parent=1 // pred_fallthru
      _
    // Predicated region
    $region70: #{gcn_vae_forward.3} parent=1 // pred_check
      _
    $region71: #{gcn_vae_forward.3} parent=1 // pred_check_branch
      %136 = sbr.rel (0) target = $region73
    $region72: #{gcn_vae_forward.3} parent=1 // pred_region
      _
    $region73: #{gcn_vae_forward.3} parent=1 // pred_fallthru
      _
    // Predicated region
    $region74: #{gcn_vae_forward.3} parent=1 // pred_check
      _
    $region75: #{gcn_vae_forward.3} parent=1 // pred_check_branch
      %138 = sbr.rel (0) target = $region77
    $region76: #{gcn_vae_forward.3} parent=1 // pred_region
      _
    $region77: #{gcn_vae_forward.3} parent=1 // pred_fallthru
      _
    // Predicated region
    $region78: #{gcn_vae_forward.3} parent=1 // pred_check
      _
    $region79: #{gcn_vae_forward.3} parent=1 // pred_check_branch
      %140 = sbr.rel (0) target = $region81
    $region80: #{gcn_vae_forward.3} parent=1 // pred_region
      _
    $region81: #{gcn_vae_forward.3} parent=1 // pred_fallthru
      _
    // Predicated region
    $region82: #{gcn_vae_forward.3} parent=1 // pred_check
      _
    $region83: #{gcn_vae_forward.3} parent=1 // pred_check_branch
      %142 = sbr.rel (0) target = $region85
    $region84: #{gcn_vae_forward.3} parent=1 // pred_region
      _
    $region85: #{gcn_vae_forward.3} parent=1 // pred_fallthru
      _
    // Predicated region
    $region86: #{gcn_vae_forward.3} parent=1 // pred_check
      _
    $region87: #{gcn_vae_forward.3} parent=1 // pred_check_branch
      %144 = sbr.rel (0) target = $region89
    $region88: #{gcn_vae_forward.3} parent=1 // pred_region
      _
    $region89: #{gcn_vae_forward.3} parent=1 // pred_fallthru
      _
    // Predicated region
    $region90: #{gcn_vae_forward.3} parent=1 // pred_check
      _
    $region91: #{gcn_vae_forward.3} parent=1 // pred_check_branch
      %146 = sbr.rel (0) target = $region93
    $region92: #{gcn_vae_forward.3} parent=1 // pred_region
      _
    $region93: #{gcn_vae_forward.3} parent=1 // pred_fallthru
      _
    // Predicated region
    $region94: #{gcn_vae_forward.3} parent=1 // pred_check
      _
    $region95: #{gcn_vae_forward.3} parent=1 // pred_check_branch
      %148 = sbr.rel (0) target = $region97
    $region96: #{gcn_vae_forward.3} parent=1 // pred_region
      _
    $region97: #{gcn_vae_forward.3} parent=1 // pred_fallthru
      _
    // Predicated region
    $region98: #{gcn_vae_forward.3} parent=1 // pred_check
      _
    $region99: #{gcn_vae_forward.3} parent=1 // pred_check_branch
      %150 = sbr.rel (0) target = $region101
    $region100: #{gcn_vae_forward.3} parent=1 // pred_region
      _
    $region101: #{gcn_vae_forward.3} parent=1 // pred_fallthru
      _
    // Predicated region
    $region102: #{gcn_vae_forward.3} parent=1 // pred_check
      _
    $region103: #{gcn_vae_forward.3} parent=1 // pred_check_branch
      %152 = sbr.rel (0) target = $region105
    $region104: #{gcn_vae_forward.3} parent=1 // pred_region
      _
    $region105: #{gcn_vae_forward.3} parent=1 // pred_fallthru
      _
    // Predicated region
    $region106: #{gcn_vae_forward.3} parent=1 // pred_check
      _
    $region107: #{gcn_vae_forward.3} parent=1 // pred_check_branch
      %154 = sbr.rel (0) target = $region109
    $region108: #{gcn_vae_forward.3} parent=1 // pred_region
      _
    $region109: #{gcn_vae_forward.3} parent=1 // pred_fallthru
      _
    // Predicated region
    $region110: #{gcn_vae_forward.3} parent=1 // pred_check
      _
    $region111: #{gcn_vae_forward.3} parent=1 // pred_check_branch
      %156 = sbr.rel (0) target = $region113
    $region112: #{gcn_vae_forward.3} parent=1 // pred_region
      _
    $region113: #{gcn_vae_forward.3} parent=1 // pred_fallthru
      _
    // Predicated region
    $region114: #{gcn_vae_forward.3} parent=1 // pred_check
      _
    $region115: #{gcn_vae_forward.3} parent=1 // pred_check_branch
      %158 = sbr.rel (0) target = $region117
    $region116: #{gcn_vae_forward.3} parent=1 // pred_region
      _
    $region117: #{gcn_vae_forward.3} parent=1 // pred_fallthru
      _
    // Predicated region
    $region118: #{gcn_vae_forward.3} parent=1 // pred_check
      _
    $region119: #{gcn_vae_forward.3} parent=1 // pred_check_branch
      %160 = sbr.rel (0) target = $region121
    $region120: #{gcn_vae_forward.3} parent=1 // pred_region
      _
    $region121: #{gcn_vae_forward.3} parent=1 // pred_fallthru
      _
    // Predicated region
    $region122: #{gcn_vae_forward.3} parent=1 // pred_check
      _
    $region123: #{gcn_vae_forward.3} parent=1 // pred_check_branch
      %162 = sbr.rel (0) target = $region125
    $region124: #{gcn_vae_forward.3} parent=1 // pred_region
      _
    $region125: #{gcn_vae_forward.3} parent=1 // pred_fallthru
      _
    // Predicated region
    $region126: #{gcn_vae_forward.3} parent=1 // pred_check
      _
    $region127: #{gcn_vae_forward.3} parent=1 // pred_check_branch
      %164 = sbr.rel (0) target = $region129
    $region128: #{gcn_vae_forward.3} parent=1 // pred_region
      _
    $region129: #{gcn_vae_forward.3} parent=1 // pred_fallthru
      _
    // Predicated region
    $region130: #{gcn_vae_forward.3} parent=1 // pred_check
      _
    $region131: #{gcn_vae_forward.3} parent=1 // pred_check_branch
      %166 = sbr.rel (0) target = $region133
    $region132: #{gcn_vae_forward.3} parent=1 // pred_region
      _
    $region133: #{gcn_vae_forward.3} parent=1 // pred_fallthru
      _
    // Predicated region
    $region134: #{gcn_vae_forward.3} parent=1 // pred_check
      _
    $region135: #{gcn_vae_forward.3} parent=1 // pred_check_branch
      %168 = sbr.rel (0) target = $region137
    $region136: #{gcn_vae_forward.3} parent=1 // pred_region
      _
    $region137: #{gcn_vae_forward.3} parent=1 // pred_fallthru
      _
    // Predicated region
    $region138: #{gcn_vae_forward.3} parent=1 // pred_check
      _
    $region139: #{gcn_vae_forward.3} parent=1 // pred_check_branch
      %170 = sbr.rel (0) target = $region141
    $region140: #{gcn_vae_forward.3} parent=1 // pred_region
      _
    $region141: #{gcn_vae_forward.3} parent=1 // pred_fallthru
      _
    // Predicated region
    $region142: #{gcn_vae_forward.3} parent=1 // pred_check
      _
    $region143: #{gcn_vae_forward.3} parent=1 // pred_check_branch
      %172 = sbr.rel (0) target = $region145
    $region144: #{gcn_vae_forward.3} parent=1 // pred_region
      _
    $region145: #{gcn_vae_forward.3} parent=1 // pred_fallthru
      _
    // Predicated region
    $region146: #{gcn_vae_forward.3} parent=1 // pred_check
      _
    $region147: #{gcn_vae_forward.3} parent=1 // pred_check_branch
      %174 = sbr.rel (0) target = $region149
    $region148: #{gcn_vae_forward.3} parent=1 // pred_region
      _
    $region149: #{gcn_vae_forward.3} parent=1 // pred_fallthru
      _
    // Predicated region
    $region150: #{gcn_vae_forward.3} parent=1 // pred_check
      _
    $region151: #{gcn_vae_forward.3} parent=1 // pred_check_branch
      %176 = sbr.rel (0) target = $region153
    $region152: #{gcn_vae_forward.3} parent=1 // pred_region
      _
    $region153: #{gcn_vae_forward.3} parent=1 // pred_fallthru
      _
    // Predicated region
    $region154: #{gcn_vae_forward.3} parent=1 // pred_check
      _
    $region155: #{gcn_vae_forward.3} parent=1 // pred_check_branch
      %178 = sbr.rel (0) target = $region157
    $region156: #{gcn_vae_forward.3} parent=1 // pred_region
      _
    $region157: #{gcn_vae_forward.3} parent=1 // pred_fallthru
      _
    %v179 = vld [vmem:[%s3] sm:$0xff]
    %v180 = vld [vmem:[%s3 + $0x8] sm:$0xff]
    %v181 = vld [vmem:[%s1] sm:$0xff]
    %v182 = vld [vmem:[%s5] sm:$0xff]
    %v183 = vld [vmem:[%s5 + $0x8] sm:$0xff]
    %v184 = vld [vmem:[%s5 + $0x10] sm:$0xff]
    %v185 = vld [vmem:[%s5 + $0x18] sm:$0xff]
    %v186 = vld [vmem:[%s5 + $0x20] sm:$0xff]
    %v187 = vld [vmem:[%s5 + $0x28] sm:$0xff]
    %v188 = vld [vmem:[%s5 + $0x30] sm:$0xff]
    %v189 = vld [vmem:[%s5 + $0x38] sm:$0xff]
    %v190 = vld [vmem:[%s5 + $0x40] sm:$0xff]
    %v191 = vld [vmem:[%s5 + $0x48] sm:$0xff]
    %v192 = vld [vmem:[%s5 + $0x50] sm:$0xff]
    %v193 = vld [vmem:[%s5 + $0x58] sm:$0xff]
    %v194 = vld [vmem:[%s5 + $0x60] sm:$0xff]
    %v195 = vld [vmem:[%s5 + $0x68] sm:$0xff]
    %v196 = vld [vmem:[%s5 + $0x70] sm:$0xff]
    %v197 = vld [vmem:[%s5 + $0x78] sm:$0xff]
    %v198 = vld [vmem:[%s5 + $0x80] sm:$0xff]
    %v199 = vld [vmem:[%s5 + $0x88] sm:$0xff]
    %v200 = vld [vmem:[%s5 + $0x90] sm:$0x3f]
    %vm201 = vcmask 179200
    %v203 = vsel %vm201, %v180, 0
    %vm205 = vcmask 1045504
    %v207 = vsel %vm205, %v200, 0
    %209 = vmatprep.subr.mxu0 0.0
    %210 = vmatpush1.msra.mxu0 %v182
    %211 = vmatprep.subr.mxu0 0.0
    %212 = vmatpush1.msra.mxu0 %v183
    %213 = vmatprep.subr.mxu0 0.0
    %214 = vmatpush1.msra.mxu0 %v184
    %215 = vmatprep.subr.mxu0 0.0
    %216 = vmatpush1.msra.mxu0 %v185
    %217 = vmatprep.subr.mxu0 0.0
    %218 = vmatpush1.msra.mxu0 %v186
    %219 = vmatprep.subr.mxu0 0.0
    %220 = vmatpush1.msra.mxu0 %v187
    %221 = vmatprep.subr.mxu0 0.0
    %222 = vmatpush1.msra.mxu0 %v188
    %223 = vmatprep.subr.mxu0 0.0
    %224 = vmatpush1.msra.mxu0 %v189
    %225 = vmatprep.subr.mxu0 0.0
    %226 = vmatpush1.msra.mxu0 %v190
    %227 = vmatprep.subr.mxu0 0.0
    %228 = vmatpush1.msra.mxu0 %v191
    %229 = vmatprep.subr.mxu0 0.0
    %230 = vmatpush1.msra.mxu0 %v192
    %231 = vmatprep.subr.mxu0 0.0
    %232 = vmatpush1.msra.mxu0 %v193
    %233 = vmatprep.subr.mxu0 0.0
    %234 = vmatpush1.msra.mxu0 %v194
    %235 = vmatprep.subr.mxu0 0.0
    %236 = vmatpush1.msra.mxu0 %v195
    %237 = vmatprep.subr.mxu0 0.0
    %238 = vmatpush1.msra.mxu0 %v196
    %239 = vmatprep.subr.mxu0 0.0
    %240 = vmatpush1.msra.mxu0 %v197
    %241 = vmatprep.subr.mxu0 0.0
    %242 = vmatpush1.msra.mxu0 %v198
    %243 = vmatprep.subr.mxu0 0.0
    %244 = vmatpush1.msra.mxu0 %v199
    %245 = vmatprep.subr.mxu0 0.0
    %246 = vmatpush1.msra.mxu0 %v207
    %247 = vmatprep.subr.mxu0 0.0
    %248 = vmatpush1.msra.mxu0 0.0
    %249 = vmatprep.subr.mxu0 0.0
    %250 = vmatpush1.msra.mxu0 0.0
    %251 = vmatprep.subr.mxu0 0.0
    %252 = vmatpush1.msra.mxu0 0.0
    %253 = vmatprep.subr.mxu0 0.0
    %254 = vmatpush1.msra.mxu0 0.0
    %255 = vmatprep.subr.mxu0 0.0
    %256 = vmatpush1.msra.mxu0 0.0
    %257 = vmatprep.subr.mxu0 0.0
    %258 = vmatpush1.msra.mxu0 0.0
    %259 = vmatprep.subr.mxu0 0.0
    %260 = vmatpush1.msra.mxu0 0.0
    %261 = vmatprep.subr.mxu0 0.0
    %262 = vmatpush1.msra.mxu0 0.0
    %263 = vmatprep.subr.mxu0 0.0
    %264 = vmatpush1.msra.mxu0 0.0
    %265 = vmatprep.subr.mxu0 0.0
    %266 = vmatpush1.msra.mxu0 0.0
    %267 = vmatprep.subr.mxu0 0.0
    %268 = vmatpush1.msra.mxu0 0.0
    %269 = vmatprep.subr.mxu0 0.0
    %270 = vmatpush1.msra.mxu0 0.0
    %271 = vmatprep.subr.mxu0 0.0
    %272 = vmatpush1.msra.mxu0 0.0
    %273 = vmatprep.mubr.f32.mxu0 %v203
    %274 = vmatmul.mubr.f32.gmra.mrb[0].mxu0 %v179
    %v275 = vpop.f32.mrb[0].mxu0
    %v276 = vadd.f32 0.0, %v275
    %v277 = vpop.f32.mrb[0].mxu0
    %278 = vdwg.mxu0
    %v279 = vld [vmem:[%s7] sm:$0x1]
    %v281 = vlaneseq
    %v282 = vshrl.u32 %v281, 7
    %v283 = vsub.s32 0, %v282
    %v284 = vrot.slane %v279, %v283
    %vm286 = vcmask 64512
    %v288 = vsel %vm286, %v181, 0
    %290 = vmatprep.subr.mxu0 0.0
    %291 = vmatpush1.msra.mxu0 %v276
    %292 = vmatprep.subr.mxu0 0.0
    %293 = vmatpush1.msra.mxu0 0.0
    %294 = vmatprep.subr.mxu0 0.0
    %295 = vmatpush1.msra.mxu0 0.0
    %296 = vmatprep.subr.mxu0 0.0
    %297 = vmatpush1.msra.mxu0 0.0
    %298 = vmatprep.subr.mxu0 0.0
    %299 = vmatpush1.msra.mxu0 0.0
    %300 = vmatprep.subr.mxu0 0.0
    %301 = vmatpush1.msra.mxu0 0.0
    %302 = vmatprep.subr.mxu0 0.0
    %303 = vmatpush1.msra.mxu0 0.0
    %304 = vmatprep.subr.mxu0 0.0
    %305 = vmatpush1.msra.mxu0 0.0
    %306 = vmatprep.subr.mxu0 0.0
    %307 = vmatpush1.msra.mxu0 0.0
    %308 = vmatprep.subr.mxu0 0.0
    %309 = vmatpush1.msra.mxu0 0.0
    %310 = vmatprep.subr.mxu0 0.0
    %311 = vmatpush1.msra.mxu0 0.0
    %312 = vmatprep.subr.mxu0 0.0
    %313 = vmatpush1.msra.mxu0 0.0
    %314 = vmatprep.subr.mxu0 0.0
    %315 = vmatpush1.msra.mxu0 0.0
    %316 = vmatprep.subr.mxu0 0.0
    %317 = vmatpush1.msra.mxu0 0.0
    %318 = vmatprep.subr.mxu0 0.0
    %319 = vmatpush1.msra.mxu0 0.0
    %320 = vmatprep.subr.mxu0 0.0
    %321 = vmatpush1.msra.mxu0 0.0
    %322 = vmatprep.subr.mxu0 0.0
    %323 = vmatpush1.msra.mxu0 0.0
    %324 = vmatprep.subr.mxu0 0.0
    %325 = vmatpush1.msra.mxu0 0.0
    %326 = vmatprep.subr.mxu0 0.0
    %327 = vmatpush1.msra.mxu0 0.0
    %328 = vmatprep.subr.mxu0 0.0
    %329 = vmatpush1.msra.mxu0 0.0
    %330 = vmatprep.subr.mxu0 0.0
    %331 = vmatpush1.msra.mxu0 0.0
    %332 = vmatprep.subr.mxu0 0.0
    %333 = vmatpush1.msra.mxu0 0.0
    %334 = vmatprep.subr.mxu0 0.0
    %335 = vmatpush1.msra.mxu0 0.0
    %336 = vmatprep.subr.mxu0 0.0
    %337 = vmatpush1.msra.mxu0 0.0
    %338 = vmatprep.subr.mxu0 0.0
    %339 = vmatpush1.msra.mxu0 0.0
    %340 = vmatprep.subr.mxu0 0.0
    %341 = vmatpush1.msra.mxu0 0.0
    %342 = vmatprep.subr.mxu0 0.0
    %343 = vmatpush1.msra.mxu0 0.0
    %344 = vmatprep.subr.mxu0 0.0
    %345 = vmatpush1.msra.mxu0 0.0
    %346 = vmatprep.subr.mxu0 0.0
    %347 = vmatpush1.msra.mxu0 0.0
    %348 = vmatprep.subr.mxu0 0.0
    %349 = vmatpush1.msra.mxu0 0.0
    %350 = vmatprep.subr.mxu0 0.0
    %351 = vmatpush1.msra.mxu0 0.0
    %352 = vmatprep.subr.mxu0 0.0
    %353 = vmatpush1.msra.mxu0 0.0
    %354 = vmatprep.mubr.f32.mxu0 0.0
    %355 = vmatmul.mubr.f32.gmra.mrb[0].mxu0 %v288
    %v356 = vpop.f32.mrb[0].mxu0
    %v357 = vadd.f32 %v284, %v356
    %v358 = vpop.f32.mrb[0].mxu0
    %359 = vdwg.mxu0
    %v360 = vld [vmem:[%s9] sm:$0xff]
    %v361 = vld [vmem:[%s9 + $0x8] sm:$0xff]
    %v362 = vld [vmem:[%s9 + $0x10] sm:$0xff]
    %v363 = vld [vmem:[%s9 + $0x18] sm:$0xff]
    %v364 = vld [vmem:[%s9 + $0x20] sm:$0xff]
    %v365 = vld [vmem:[%s9 + $0x28] sm:$0xff]
    %v366 = vld [vmem:[%s9 + $0x30] sm:$0xff]
    %v367 = vld [vmem:[%s9 + $0x38] sm:$0xff]
    %v368 = vld [vmem:[%s9 + $0x40] sm:$0xff]
    %v369 = vld [vmem:[%s9 + $0x48] sm:$0xff]
    %v370 = vld [vmem:[%s9 + $0x50] sm:$0xff]
    %v371 = vld [vmem:[%s9 + $0x58] sm:$0xff]
    %v372 = vld [vmem:[%s9 + $0x60] sm:$0xff]
    %v373 = vld [vmem:[%s9 + $0x68] sm:$0xff]
    %v374 = vld [vmem:[%s9 + $0x70] sm:$0xff]
    %v375 = vld [vmem:[%s9 + $0x78] sm:$0xff]
    %v376 = vld [vmem:[%s9 + $0x80] sm:$0xff]
    %v377 = vld [vmem:[%s9 + $0x88] sm:$0xff]
    %v378 = vld [vmem:[%s9 + $0x90] sm:$0x3f]
    %v380 = vsel %vm205, %v378, 0
    %382 = vmatprep.subr.mxu0 0.0
    %383 = vmatpush1.msra.mxu0 %v360
    %384 = vmatprep.subr.mxu0 0.0
    %385 = vmatpush1.msra.mxu0 %v361
    %386 = vmatprep.subr.mxu0 0.0
    %387 = vmatpush1.msra.mxu0 %v362
    %388 = vmatprep.subr.mxu0 0.0
    %389 = vmatpush1.msra.mxu0 %v363
    %390 = vmatprep.subr.mxu0 0.0
    %391 = vmatpush1.msra.mxu0 %v364
    %392 = vmatprep.subr.mxu0 0.0
    %393 = vmatpush1.msra.mxu0 %v365
    %394 = vmatprep.subr.mxu0 0.0
    %395 = vmatpush1.msra.mxu0 %v366
    %396 = vmatprep.subr.mxu0 0.0
    %397 = vmatpush1.msra.mxu0 %v367
    %398 = vmatprep.subr.mxu0 0.0
    %399 = vmatpush1.msra.mxu0 %v368
    %400 = vmatprep.subr.mxu0 0.0
    %401 = vmatpush1.msra.mxu0 %v369
    %402 = vmatprep.subr.mxu0 0.0
    %403 = vmatpush1.msra.mxu0 %v370
    %404 = vmatprep.subr.mxu0 0.0
    %405 = vmatpush1.msra.mxu0 %v371
    %406 = vmatprep.subr.mxu0 0.0
    %407 = vmatpush1.msra.mxu0 %v372
    %408 = vmatprep.subr.mxu0 0.0
    %409 = vmatpush1.msra.mxu0 %v373
    %410 = vmatprep.subr.mxu0 0.0
    %411 = vmatpush1.msra.mxu0 %v374
    %412 = vmatprep.subr.mxu0 0.0
    %413 = vmatpush1.msra.mxu0 %v375
    %414 = vmatprep.subr.mxu0 0.0
    %415 = vmatpush1.msra.mxu0 %v376
    %416 = vmatprep.subr.mxu0 0.0
    %417 = vmatpush1.msra.mxu0 %v377
    %418 = vmatprep.subr.mxu0 0.0
    %419 = vmatpush1.msra.mxu0 %v380
    %420 = vmatprep.subr.mxu0 0.0
    %421 = vmatpush1.msra.mxu0 0.0
    %422 = vmatprep.subr.mxu0 0.0
    %423 = vmatpush1.msra.mxu0 0.0
    %424 = vmatprep.subr.mxu0 0.0
    %425 = vmatpush1.msra.mxu0 0.0
    %426 = vmatprep.subr.mxu0 0.0
    %427 = vmatpush1.msra.mxu0 0.0
    %428 = vmatprep.subr.mxu0 0.0
    %429 = vmatpush1.msra.mxu0 0.0
    %430 = vmatprep.subr.mxu0 0.0
    %431 = vmatpush1.msra.mxu0 0.0
    %432 = vmatprep.subr.mxu0 0.0
    %433 = vmatpush1.msra.mxu0 0.0
    %434 = vmatprep.subr.mxu0 0.0
    %435 = vmatpush1.msra.mxu0 0.0
    %436 = vmatprep.subr.mxu0 0.0
    %437 = vmatpush1.msra.mxu0 0.0
    %438 = vmatprep.subr.mxu0 0.0
    %439 = vmatpush1.msra.mxu0 0.0
    %440 = vmatprep.subr.mxu0 0.0
    %441 = vmatpush1.msra.mxu0 0.0
    %442 = vmatprep.subr.mxu0 0.0
    %443 = vmatpush1.msra.mxu0 0.0
    %444 = vmatprep.subr.mxu0 0.0
    %445 = vmatpush1.msra.mxu0 0.0
    %446 = vmatprep.mubr.f32.mxu0 %v203
    %447 = vmatmul.mubr.f32.gmra.mrb[0].mxu0 %v179
    %v448 = vpop.f32.mrb[0].mxu0
    %v449 = vadd.f32 0.0, %v448
    %v450 = vpop.f32.mrb[0].mxu0
    %451 = vdwg.mxu0
    %v452 = vld [vmem:[%s11] sm:$0x1]
    %v454 = vlaneseq
    %v455 = vshrl.u32 %v454, 7
    %v456 = vsub.s32 0, %v455
    %v457 = vrot.slane %v452, %v456
    %459 = vmatprep.subr.mxu0 0.0
    %460 = vmatpush1.msra.mxu0 %v449
    %461 = vmatprep.subr.mxu0 0.0
    %462 = vmatpush1.msra.mxu0 0.0
    %463 = vmatprep.subr.mxu0 0.0
    %464 = vmatpush1.msra.mxu0 0.0
    %465 = vmatprep.subr.mxu0 0.0
    %466 = vmatpush1.msra.mxu0 0.0
    %467 = vmatprep.subr.mxu0 0.0
    %468 = vmatpush1.msra.mxu0 0.0
    %469 = vmatprep.subr.mxu0 0.0
    %470 = vmatpush1.msra.mxu0 0.0
    %471 = vmatprep.subr.mxu0 0.0
    %472 = vmatpush1.msra.mxu0 0.0
    %473 = vmatprep.subr.mxu0 0.0
    %474 = vmatpush1.msra.mxu0 0.0
    %475 = vmatprep.subr.mxu0 0.0
    %476 = vmatpush1.msra.mxu0 0.0
    %477 = vmatprep.subr.mxu0 0.0
    %478 = vmatpush1.msra.mxu0 0.0
    %479 = vmatprep.subr.mxu0 0.0
    %480 = vmatpush1.msra.mxu0 0.0
    %481 = vmatprep.subr.mxu0 0.0
    %482 = vmatpush1.msra.mxu0 0.0
    %483 = vmatprep.subr.mxu0 0.0
    %484 = vmatpush1.msra.mxu0 0.0
    %485 = vmatprep.subr.mxu0 0.0
    %486 = vmatpush1.msra.mxu0 0.0
    %487 = vmatprep.subr.mxu0 0.0
    %488 = vmatpush1.msra.mxu0 0.0
    %489 = vmatprep.subr.mxu0 0.0
    %490 = vmatpush1.msra.mxu0 0.0
    %491 = vmatprep.subr.mxu0 0.0
    %492 = vmatpush1.msra.mxu0 0.0
    %493 = vmatprep.subr.mxu0 0.0
    %494 = vmatpush1.msra.mxu0 0.0
    %495 = vmatprep.subr.mxu0 0.0
    %496 = vmatpush1.msra.mxu0 0.0
    %497 = vmatprep.subr.mxu0 0.0
    %498 = vmatpush1.msra.mxu0 0.0
    %499 = vmatprep.subr.mxu0 0.0
    %500 = vmatpush1.msra.mxu0 0.0
    %501 = vmatprep.subr.mxu0 0.0
    %502 = vmatpush1.msra.mxu0 0.0
    %503 = vmatprep.subr.mxu0 0.0
    %504 = vmatpush1.msra.mxu0 0.0
    %505 = vmatprep.subr.mxu0 0.0
    %506 = vmatpush1.msra.mxu0 0.0
    %507 = vmatprep.subr.mxu0 0.0
    %508 = vmatpush1.msra.mxu0 0.0
    %509 = vmatprep.subr.mxu0 0.0
    %510 = vmatpush1.msra.mxu0 0.0
    %511 = vmatprep.subr.mxu0 0.0
    %512 = vmatpush1.msra.mxu0 0.0
    %513 = vmatprep.subr.mxu0 0.0
    %514 = vmatpush1.msra.mxu0 0.0
    %515 = vmatprep.subr.mxu0 0.0
    %516 = vmatpush1.msra.mxu0 0.0
    %517 = vmatprep.subr.mxu0 0.0
    %518 = vmatpush1.msra.mxu0 0.0
    %519 = vmatprep.subr.mxu0 0.0
    %520 = vmatpush1.msra.mxu0 0.0
    %521 = vmatprep.subr.mxu0 0.0
    %522 = vmatpush1.msra.mxu0 0.0
    %523 = vmatprep.mubr.f32.mxu0 0.0
    %524 = vmatmul.mubr.f32.gmra.mrb[0].mxu0 %v288
    %v525 = vpop.f32.mrb[0].mxu0
    %v526 = vadd.f32 %v457, %v525
    %v527 = vpop.f32.mrb[0].mxu0
    %528 = vdwg.mxu0
    %v529 = vld [vmem:[%s13] sm:$0xff]
    %v530 = vld [vmem:[%s13 + $0x8] sm:$0xff]
    %v531 = vld [vmem:[%s13 + $0x10] sm:$0xff]
    %v532 = vld [vmem:[%s13 + $0x18] sm:$0xff]
    %v533 = vld [vmem:[%s13 + $0x20] sm:$0xff]
    %v534 = vld [vmem:[%s13 + $0x28] sm:$0xff]
    %v535 = vld [vmem:[%s13 + $0x30] sm:$0xff]
    %v536 = vld [vmem:[%s13 + $0x38] sm:$0xff]
    %v537 = vld [vmem:[%s13 + $0x40] sm:$0xff]
    %v538 = vld [vmem:[%s13 + $0x48] sm:$0xff]
    %v539 = vld [vmem:[%s13 + $0x50] sm:$0xff]
    %v540 = vld [vmem:[%s13 + $0x58] sm:$0xff]
    %v541 = vld [vmem:[%s13 + $0x60] sm:$0xf]
    %v542 = vld [vmem:[%s15] sm:$0x1]
    %v544 = vlaneseq
    %v545 = vshrl.u32 %v544, 7
    %v546 = vsub.s32 0, %v545
    %v547 = vrot.slane %v542, %v546
    %vm549 = vcmask 818176
    %v551 = vsel %vm549, %v357, 0
    %vm553 = vcmask 1043456
    %v555 = vsel %vm553, %v541, 0
    %557 = vmatprep.subr.mxu0 0.0
    %558 = vmatpush1.msra.mxu0 %v529
    %559 = vmatprep.subr.mxu0 0.0
    %560 = vmatpush1.msra.mxu0 %v530
    %561 = vmatprep.subr.mxu0 0.0
    %562 = vmatpush1.msra.mxu0 %v531
    %563 = vmatprep.subr.mxu0 0.0
    %564 = vmatpush1.msra.mxu0 %v532
    %565 = vmatprep.subr.mxu0 0.0
    %566 = vmatpush1.msra.mxu0 %v533
    %567 = vmatprep.subr.mxu0 0.0
    %568 = vmatpush1.msra.mxu0 %v534
    %569 = vmatprep.subr.mxu0 0.0
    %570 = vmatpush1.msra.mxu0 %v535
    %571 = vmatprep.subr.mxu0 0.0
    %572 = vmatpush1.msra.mxu0 %v536
    %573 = vmatprep.subr.mxu0 0.0
    %574 = vmatpush1.msra.mxu0 %v537
    %575 = vmatprep.subr.mxu0 0.0
    %576 = vmatpush1.msra.mxu0 %v538
    %577 = vmatprep.subr.mxu0 0.0
    %578 = vmatpush1.msra.mxu0 %v539
    %579 = vmatprep.subr.mxu0 0.0
    %580 = vmatpush1.msra.mxu0 %v540
    %581 = vmatprep.subr.mxu0 0.0
    %582 = vmatpush1.msra.mxu0 %v555
    %583 = vmatprep.subr.mxu0 0.0
    %584 = vmatpush1.msra.mxu0 0.0
    %585 = vmatprep.subr.mxu0 0.0
    %586 = vmatpush1.msra.mxu0 0.0
    %587 = vmatprep.subr.mxu0 0.0
    %588 = vmatpush1.msra.mxu0 0.0
    %589 = vmatprep.subr.mxu0 0.0
    %590 = vmatpush1.msra.mxu0 0.0
    %591 = vmatprep.subr.mxu0 0.0
    %592 = vmatpush1.msra.mxu0 0.0
    %593 = vmatprep.subr.mxu0 0.0
    %594 = vmatpush1.msra.mxu0 0.0
    %595 = vmatprep.subr.mxu0 0.0
    %596 = vmatpush1.msra.mxu0 0.0
    %597 = vmatprep.subr.mxu0 0.0
    %598 = vmatpush1.msra.mxu0 0.0
    %599 = vmatprep.subr.mxu0 0.0
    %600 = vmatpush1.msra.mxu0 0.0
    %601 = vmatprep.subr.mxu0 0.0
    %602 = vmatpush1.msra.mxu0 0.0
    %603 = vmatprep.subr.mxu0 0.0
    %604 = vmatpush1.msra.mxu0 0.0
    %605 = vmatprep.subr.mxu0 0.0
    %606 = vmatpush1.msra.mxu0 0.0
    %607 = vmatprep.subr.mxu0 0.0
    %608 = vmatpush1.msra.mxu0 0.0
    %609 = vmatprep.subr.mxu0 0.0
    %610 = vmatpush1.msra.mxu0 0.0
    %611 = vmatprep.subr.mxu0 0.0
    %612 = vmatpush1.msra.mxu0 0.0
    %613 = vmatprep.subr.mxu0 0.0
    %614 = vmatpush1.msra.mxu0 0.0
    %615 = vmatprep.subr.mxu0 0.0
    %616 = vmatpush1.msra.mxu0 0.0
    %617 = vmatprep.subr.mxu0 0.0
    %618 = vmatpush1.msra.mxu0 0.0
    %619 = vmatprep.subr.mxu0 0.0
    %620 = vmatpush1.msra.mxu0 0.0
    %621 = vmatprep.mubr.f32.mxu0 0.0
    %622 = vmatmul.mubr.f32.gmra.mrb[0].mxu0 %v551
    %v623 = vpop.f32.mrb[0].mxu0
    %v624 = vadd.f32 %v547, %v623
    %v625 = vpop.f32.mrb[0].mxu0
    %626 = vdwg.mxu0
    %vm627 = vcmp.ge.f32.partialorder %v624, 0.0
    %v628 = vmul.f32 %v624, 0.01
    %v629 = vsel %vm627, %v624, %v628
    %v630 = vld [vmem:[%s17] sm:$0xff]
    %v631 = vld [vmem:[%s17 + $0x8] sm:$0xff]
    %v632 = vld [vmem:[%s17 + $0x10] sm:$0xff]
    %v633 = vld [vmem:[%s17 + $0x18] sm:$0xff]
    %v634 = vld [vmem:[%s17 + $0x20] sm:$0xff]
    %v635 = vld [vmem:[%s17 + $0x28] sm:$0xff]
    %v636 = vld [vmem:[%s17 + $0x30] sm:$0xff]
    %v637 = vld [vmem:[%s17 + $0x38] sm:$0xff]
    %v638 = vld [vmem:[%s17 + $0x40] sm:$0x3f]
    %v639 = vld [vmem:[%s19] sm:$0x1]
    %v641 = vlaneseq
    %v642 = vshrl.u32 %v641, 7
    %v643 = vsub.s32 0, %v642
    %v644 = vrot.slane %v639, %v643
    %vm646 = vcmask 572416
    %v648 = vsel %vm646, %v629, 0
    %v651 = vsel %vm205, %v638, 0
    %653 = vmatprep.subr.mxu0 0.0
    %654 = vmatpush1.msra.mxu0 %v630
    %655 = vmatprep.subr.mxu0 0.0
    %656 = vmatpush1.msra.mxu0 %v631
    %657 = vmatprep.subr.mxu0 0.0
    %658 = vmatpush1.msra.mxu0 %v632
    %659 = vmatprep.subr.mxu0 0.0
    %660 = vmatpush1.msra.mxu0 %v633
    %661 = vmatprep.subr.mxu0 0.0
    %662 = vmatpush1.msra.mxu0 %v634
    %663 = vmatprep.subr.mxu0 0.0
    %664 = vmatpush1.msra.mxu0 %v635
    %665 = vmatprep.subr.mxu0 0.0
    %666 = vmatpush1.msra.mxu0 %v636
    %667 = vmatprep.subr.mxu0 0.0
    %668 = vmatpush1.msra.mxu0 %v637
    %669 = vmatprep.subr.mxu0 0.0
    %670 = vmatpush1.msra.mxu0 %v651
    %671 = vmatprep.subr.mxu0 0.0
    %672 = vmatpush1.msra.mxu0 0.0
    %673 = vmatprep.subr.mxu0 0.0
    %674 = vmatpush1.msra.mxu0 0.0
    %675 = vmatprep.subr.mxu0 0.0
    %676 = vmatpush1.msra.mxu0 0.0
    %677 = vmatprep.subr.mxu0 0.0
    %678 = vmatpush1.msra.mxu0 0.0
    %679 = vmatprep.subr.mxu0 0.0
    %680 = vmatpush1.msra.mxu0 0.0
    %681 = vmatprep.subr.mxu0 0.0
    %682 = vmatpush1.msra.mxu0 0.0
    %683 = vmatprep.subr.mxu0 0.0
    %684 = vmatpush1.msra.mxu0 0.0
    %685 = vmatprep.subr.mxu0 0.0
    %686 = vmatpush1.msra.mxu0 0.0
    %687 = vmatprep.subr.mxu0 0.0
    %688 = vmatpush1.msra.mxu0 0.0
    %689 = vmatprep.subr.mxu0 0.0
    %690 = vmatpush1.msra.mxu0 0.0
    %691 = vmatprep.subr.mxu0 0.0
    %692 = vmatpush1.msra.mxu0 0.0
    %693 = vmatprep.subr.mxu0 0.0
    %694 = vmatpush1.msra.mxu0 0.0
    %695 = vmatprep.subr.mxu0 0.0
    %696 = vmatpush1.msra.mxu0 0.0
    %697 = vmatprep.subr.mxu0 0.0
    %698 = vmatpush1.msra.mxu0 0.0
    %699 = vmatprep.subr.mxu0 0.0
    %700 = vmatpush1.msra.mxu0 0.0
    %701 = vmatprep.subr.mxu0 0.0
    %702 = vmatpush1.msra.mxu0 0.0
    %703 = vmatprep.subr.mxu0 0.0
    %704 = vmatpush1.msra.mxu0 0.0
    %705 = vmatprep.subr.mxu0 0.0
    %706 = vmatpush1.msra.mxu0 0.0
    %707 = vmatprep.subr.mxu0 0.0
    %708 = vmatpush1.msra.mxu0 0.0
    %709 = vmatprep.subr.mxu0 0.0
    %710 = vmatpush1.msra.mxu0 0.0
    %711 = vmatprep.subr.mxu0 0.0
    %712 = vmatpush1.msra.mxu0 0.0
    %713 = vmatprep.subr.mxu0 0.0
    %714 = vmatpush1.msra.mxu0 0.0
    %715 = vmatprep.subr.mxu0 0.0
    %716 = vmatpush1.msra.mxu0 0.0
    %717 = vmatprep.mubr.f32.mxu0 0.0
    %718 = vmatmul.mubr.f32.gmra.mrb[0].mxu0 %v648
    %v719 = vpop.f32.mrb[0].mxu0
    %v720 = vadd.f32 %v644, %v719
    %v721 = vpop.f32.mrb[0].mxu0
    %722 = vdwg.mxu0
    %vm723 = vcmp.ge.f32.partialorder %v720, 0.0
    %v724 = vmul.f32 %v720, 0.01
    %v725 = vsel %vm723, %v720, %v724
    %v726 = vld [vmem:[%s21] sm:$0xff]
    %v727 = vld [vmem:[%s21 + $0x8] sm:$0xff]
    %v728 = vld [vmem:[%s21 + $0x10] sm:$0xff]
    %v729 = vld [vmem:[%s21 + $0x18] sm:$0xff]
    %v730 = vld [vmem:[%s21 + $0x20] sm:$0xff]
    %v731 = vld [vmem:[%s23] sm:$0x1]
    %v733 = vlaneseq
    %v734 = vshrl.u32 %v733, 7
    %v735 = vsub.s32 0, %v734
    %v736 = vrot.slane %v731, %v735
    %vm738 = vcmask 326656
    %v740 = vsel %vm738, %v725, 0
    %742 = vmatprep.subr.mxu0 0.0
    %743 = vmatpush1.msra.mxu0 %v726
    %744 = vmatprep.subr.mxu0 0.0
    %745 = vmatpush1.msra.mxu0 %v727
    %746 = vmatprep.subr.mxu0 0.0
    %747 = vmatpush1.msra.mxu0 %v728
    %748 = vmatprep.subr.mxu0 0.0
    %749 = vmatpush1.msra.mxu0 %v729
    %750 = vmatprep.subr.mxu0 0.0
    %751 = vmatpush1.msra.mxu0 %v730
    %752 = vmatprep.subr.mxu0 0.0
    %753 = vmatpush1.msra.mxu0 0.0
    %754 = vmatprep.subr.mxu0 0.0
    %755 = vmatpush1.msra.mxu0 0.0
    %756 = vmatprep.subr.mxu0 0.0
    %757 = vmatpush1.msra.mxu0 0.0
    %758 = vmatprep.subr.mxu0 0.0
    %759 = vmatpush1.msra.mxu0 0.0
    %760 = vmatprep.subr.mxu0 0.0
    %761 = vmatpush1.msra.mxu0 0.0
    %762 = vmatprep.subr.mxu0 0.0
    %763 = vmatpush1.msra.mxu0 0.0
    %764 = vmatprep.subr.mxu0 0.0
    %765 = vmatpush1.msra.mxu0 0.0
    %766 = vmatprep.subr.mxu0 0.0
    %767 = vmatpush1.msra.mxu0 0.0
    %768 = vmatprep.subr.mxu0 0.0
    %769 = vmatpush1.msra.mxu0 0.0
    %770 = vmatprep.subr.mxu0 0.0
    %771 = vmatpush1.msra.mxu0 0.0
    %772 = vmatprep.subr.mxu0 0.0
    %773 = vmatpush1.msra.mxu0 0.0
    %774 = vmatprep.subr.mxu0 0.0
    %775 = vmatpush1.msra.mxu0 0.0
    %776 = vmatprep.subr.mxu0 0.0
    %777 = vmatpush1.msra.mxu0 0.0
    %778 = vmatprep.subr.mxu0 0.0
    %779 = vmatpush1.msra.mxu0 0.0
    %780 = vmatprep.subr.mxu0 0.0
    %781 = vmatpush1.msra.mxu0 0.0
    %782 = vmatprep.subr.mxu0 0.0
    %783 = vmatpush1.msra.mxu0 0.0
    %784 = vmatprep.subr.mxu0 0.0
    %785 = vmatpush1.msra.mxu0 0.0
    %786 = vmatprep.subr.mxu0 0.0
    %787 = vmatpush1.msra.mxu0 0.0
    %788 = vmatprep.subr.mxu0 0.0
    %789 = vmatpush1.msra.mxu0 0.0
    %790 = vmatprep.subr.mxu0 0.0
    %791 = vmatpush1.msra.mxu0 0.0
    %792 = vmatprep.subr.mxu0 0.0
    %793 = vmatpush1.msra.mxu0 0.0
    %794 = vmatprep.subr.mxu0 0.0
    %795 = vmatpush1.msra.mxu0 0.0
    %796 = vmatprep.subr.mxu0 0.0
    %797 = vmatpush1.msra.mxu0 0.0
    %798 = vmatprep.subr.mxu0 0.0
    %799 = vmatpush1.msra.mxu0 0.0
    %800 = vmatprep.subr.mxu0 0.0
    %801 = vmatpush1.msra.mxu0 0.0
    %802 = vmatprep.subr.mxu0 0.0
    %803 = vmatpush1.msra.mxu0 0.0
    %804 = vmatprep.subr.mxu0 0.0
    %805 = vmatpush1.msra.mxu0 0.0
    %806 = vmatprep.mubr.f32.mxu0 0.0
    %807 = vmatmul.mubr.f32.gmra.mrb[0].mxu0 %v740
    %v808 = vpop.f32.mrb[0].mxu0
    %v809 = vadd.f32 %v736, %v808
    %v810 = vpop.f32.mrb[0].mxu0
    %811 = vdwg.mxu0
    %v812 = vld [vmem:[%s25] sm:$0xff]
    %v813 = vld [vmem:[%s25 + $0x8] sm:$0xff]
    %v814 = vld [vmem:[%s25 + $0x10] sm:$0xff]
    %v815 = vld [vmem:[%s25 + $0x18] sm:$0xff]
    %v816 = vld [vmem:[%s25 + $0x20] sm:$0xff]
    %v817 = vld [vmem:[%s27] sm:$0x1]
    %v819 = vlaneseq
    %v820 = vshrl.u32 %v819, 7
    %v821 = vsub.s32 0, %v820
    %v822 = vrot.slane %v817, %v821
    %824 = vmatprep.subr.mxu0 0.0
    %825 = vmatpush1.msra.mxu0 %v812
    %826 = vmatprep.subr.mxu0 0.0
    %827 = vmatpush1.msra.mxu0 %v813
    %828 = vmatprep.subr.mxu0 0.0
    %829 = vmatpush1.msra.mxu0 %v814
    %830 = vmatprep.subr.mxu0 0.0
    %831 = vmatpush1.msra.mxu0 %v815
    %832 = vmatprep.subr.mxu0 0.0
    %833 = vmatpush1.msra.mxu0 %v816
    %834 = vmatprep.subr.mxu0 0.0
    %835 = vmatpush1.msra.mxu0 0.0
    %836 = vmatprep.subr.mxu0 0.0
    %837 = vmatpush1.msra.mxu0 0.0
    %838 = vmatprep.subr.mxu0 0.0
    %839 = vmatpush1.msra.mxu0 0.0
    %840 = vmatprep.subr.mxu0 0.0
    %841 = vmatpush1.msra.mxu0 0.0
    %842 = vmatprep.subr.mxu0 0.0
    %843 = vmatpush1.msra.mxu0 0.0
    %844 = vmatprep.subr.mxu0 0.0
    %845 = vmatpush1.msra.mxu0 0.0
    %846 = vmatprep.subr.mxu0 0.0
    %847 = vmatpush1.msra.mxu0 0.0
    %848 = vmatprep.subr.mxu0 0.0
    %849 = vmatpush1.msra.mxu0 0.0
    %850 = vmatprep.subr.mxu0 0.0
    %851 = vmatpush1.msra.mxu0 0.0
    %852 = vmatprep.subr.mxu0 0.0
    %853 = vmatpush1.msra.mxu0 0.0
    %854 = vmatprep.subr.mxu0 0.0
    %855 = vmatpush1.msra.mxu0 0.0
    %856 = vmatprep.subr.mxu0 0.0
    %857 = vmatpush1.msra.mxu0 0.0
    %858 = vmatprep.subr.mxu0 0.0
    %859 = vmatpush1.msra.mxu0 0.0
    %860 = vmatprep.subr.mxu0 0.0
    %861 = vmatpush1.msra.mxu0 0.0
    %862 = vmatprep.subr.mxu0 0.0
    %863 = vmatpush1.msra.mxu0 0.0
    %864 = vmatprep.subr.mxu0 0.0
    %865 = vmatpush1.msra.mxu0 0.0
    %866 = vmatprep.subr.mxu0 0.0
    %867 = vmatpush1.msra.mxu0 0.0
    %868 = vmatprep.subr.mxu0 0.0
    %869 = vmatpush1.msra.mxu0 0.0
    %870 = vmatprep.subr.mxu0 0.0
    %871 = vmatpush1.msra.mxu0 0.0
    %872 = vmatprep.subr.mxu0 0.0
    %873 = vmatpush1.msra.mxu0 0.0
    %874 = vmatprep.subr.mxu0 0.0
    %875 = vmatpush1.msra.mxu0 0.0
    %876 = vmatprep.subr.mxu0 0.0
    %877 = vmatpush1.msra.mxu0 0.0
    %878 = vmatprep.subr.mxu0 0.0
    %879 = vmatpush1.msra.mxu0 0.0
    %880 = vmatprep.subr.mxu0 0.0
    %881 = vmatpush1.msra.mxu0 0.0
    %882 = vmatprep.subr.mxu0 0.0
    %883 = vmatpush1.msra.mxu0 0.0
    %884 = vmatprep.subr.mxu0 0.0
    %885 = vmatpush1.msra.mxu0 0.0
    %886 = vmatprep.subr.mxu0 0.0
    %887 = vmatpush1.msra.mxu0 0.0
    %888 = vmatprep.mubr.f32.mxu0 0.0
    %889 = vmatmul.mubr.f32.gmra.mrb[0].mxu0 %v740
    %v890 = vpop.f32.mrb[0].mxu0
    %v891 = vadd.f32 %v822, %v890
    %v892 = vpop.f32.mrb[0].mxu0
    %893 = vdwg.mxu0
    %v894 = vld [vmem:[%s29] sm:$0xff]
    %v895 = vld [vmem:[%s29 + $0x8] sm:$0xff]
    %v896 = vld [vmem:[%s29 + $0x10] sm:$0xff]
    %v897 = vld [vmem:[%s29 + $0x18] sm:$0xff]
    %v898 = vld [vmem:[%s29 + $0x20] sm:$0xff]
    %v899 = vld [vmem:[%s29 + $0x28] sm:$0xff]
    %v900 = vld [vmem:[%s29 + $0x30] sm:$0x3]
    %v901 = vld [vmem:[%s31] sm:$0x1]
    %v903 = vlaneseq
    %v904 = vshrl.u32 %v903, 7
    %v905 = vsub.s32 0, %v904
    %v906 = vrot.slane %v901, %v905
    %vm908 = vcmask 408576
    %v910 = vsel %vm908, %v526, 0
    %vm912 = vcmask 1041408
    %v914 = vsel %vm912, %v900, 0
    %916 = vmatprep.subr.mxu0 0.0
    %917 = vmatpush1.msra.mxu0 %v894
    %918 = vmatprep.subr.mxu0 0.0
    %919 = vmatpush1.msra.mxu0 %v895
    %920 = vmatprep.subr.mxu0 0.0
    %921 = vmatpush1.msra.mxu0 %v896
    %922 = vmatprep.subr.mxu0 0.0
    %923 = vmatpush1.msra.mxu0 %v897
    %924 = vmatprep.subr.mxu0 0.0
    %925 = vmatpush1.msra.mxu0 %v898
    %926 = vmatprep.subr.mxu0 0.0
    %927 = vmatpush1.msra.mxu0 %v899
    %928 = vmatprep.subr.mxu0 0.0
    %929 = vmatpush1.msra.mxu0 %v914
    %930 = vmatprep.subr.mxu0 0.0
    %931 = vmatpush1.msra.mxu0 0.0
    %932 = vmatprep.subr.mxu0 0.0
    %933 = vmatpush1.msra.mxu0 0.0
    %934 = vmatprep.subr.mxu0 0.0
    %935 = vmatpush1.msra.mxu0 0.0
    %936 = vmatprep.subr.mxu0 0.0
    %937 = vmatpush1.msra.mxu0 0.0
    %938 = vmatprep.subr.mxu0 0.0
    %939 = vmatpush1.msra.mxu0 0.0
    %940 = vmatprep.subr.mxu0 0.0
    %941 = vmatpush1.msra.mxu0 0.0
    %942 = vmatprep.subr.mxu0 0.0
    %943 = vmatpush1.msra.mxu0 0.0
    %944 = vmatprep.subr.mxu0 0.0
    %945 = vmatpush1.msra.mxu0 0.0
    %946 = vmatprep.subr.mxu0 0.0
    %947 = vmatpush1.msra.mxu0 0.0
    %948 = vmatprep.subr.mxu0 0.0
    %949 = vmatpush1.msra.mxu0 0.0
    %950 = vmatprep.subr.mxu0 0.0
    %951 = vmatpush1.msra.mxu0 0.0
    %952 = vmatprep.subr.mxu0 0.0
    %953 = vmatpush1.msra.mxu0 0.0
    %954 = vmatprep.subr.mxu0 0.0
    %955 = vmatpush1.msra.mxu0 0.0
    %956 = vmatprep.subr.mxu0 0.0
    %957 = vmatpush1.msra.mxu0 0.0
    %958 = vmatprep.subr.mxu0 0.0
    %959 = vmatpush1.msra.mxu0 0.0
    %960 = vmatprep.subr.mxu0 0.0
    %961 = vmatpush1.msra.mxu0 0.0
    %962 = vmatprep.subr.mxu0 0.0
    %963 = vmatpush1.msra.mxu0 0.0
    %964 = vmatprep.subr.mxu0 0.0
    %965 = vmatpush1.msra.mxu0 0.0
    %966 = vmatprep.subr.mxu0 0.0
    %967 = vmatpush1.msra.mxu0 0.0
    %968 = vmatprep.subr.mxu0 0.0
    %969 = vmatpush1.msra.mxu0 0.0
    %970 = vmatprep.subr.mxu0 0.0
    %971 = vmatpush1.msra.mxu0 0.0
    %972 = vmatprep.subr.mxu0 0.0
    %973 = vmatpush1.msra.mxu0 0.0
    %974 = vmatprep.subr.mxu0 0.0
    %975 = vmatpush1.msra.mxu0 0.0
    %976 = vmatprep.subr.mxu0 0.0
    %977 = vmatpush1.msra.mxu0 0.0
    %978 = vmatprep.subr.mxu0 0.0
    %979 = vmatpush1.msra.mxu0 0.0
    %980 = vmatprep.mubr.f32.mxu0 0.0
    %981 = vmatmul.mubr.f32.gmra.mrb[0].mxu0 %v910
    %v982 = vpop.f32.mrb[0].mxu0
    %v983 = vadd.f32 %v906, %v982
    %v984 = vpop.f32.mrb[0].mxu0
    %985 = vdwg.mxu0
    %vm986 = vcmp.ge.f32.partialorder %v983, 0.0
    %v987 = vmul.f32 %v983, 0.01
    %v988 = vsel %vm986, %v983, %v987
    %v989 = vld [vmem:[%s33] sm:$0xff]
    %v990 = vld [vmem:[%s33 + $0x8] sm:$0xff]
    %v991 = vld [vmem:[%s33 + $0x10] sm:$0xff]
    %v992 = vld [vmem:[%s33 + $0x18] sm:$0xff]
    %v993 = vld [vmem:[%s33 + $0x20] sm:$0xff]
    %v994 = vld [vmem:[%s35] sm:$0x1]
    %v996 = vlaneseq
    %v997 = vshrl.u32 %v996, 7
    %v998 = vsub.s32 0, %v997
    %v999 = vrot.slane %v994, %v998
    %v1002 = vsel %vm738, %v988, 0
    %1004 = vmatprep.subr.mxu0 0.0
    %1005 = vmatpush1.msra.mxu0 %v989
    %1006 = vmatprep.subr.mxu0 0.0
    %1007 = vmatpush1.msra.mxu0 %v990
    %1008 = vmatprep.subr.mxu0 0.0
    %1009 = vmatpush1.msra.mxu0 %v991
    %1010 = vmatprep.subr.mxu0 0.0
    %1011 = vmatpush1.msra.mxu0 %v992
    %1012 = vmatprep.subr.mxu0 0.0
    %1013 = vmatpush1.msra.mxu0 %v993
    %1014 = vmatprep.subr.mxu0 0.0
    %1015 = vmatpush1.msra.mxu0 0.0
    %1016 = vmatprep.subr.mxu0 0.0
    %1017 = vmatpush1.msra.mxu0 0.0
    %1018 = vmatprep.subr.mxu0 0.0
    %1019 = vmatpush1.msra.mxu0 0.0
    %1020 = vmatprep.subr.mxu0 0.0
    %1021 = vmatpush1.msra.mxu0 0.0
    %1022 = vmatprep.subr.mxu0 0.0
    %1023 = vmatpush1.msra.mxu0 0.0
    %1024 = vmatprep.subr.mxu0 0.0
    %1025 = vmatpush1.msra.mxu0 0.0
    %1026 = vmatprep.subr.mxu0 0.0
    %1027 = vmatpush1.msra.mxu0 0.0
    %1028 = vmatprep.subr.mxu0 0.0
    %1029 = vmatpush1.msra.mxu0 0.0
    %1030 = vmatprep.subr.mxu0 0.0
    %1031 = vmatpush1.msra.mxu0 0.0
    %1032 = vmatprep.subr.mxu0 0.0
    %1033 = vmatpush1.msra.mxu0 0.0
    %1034 = vmatprep.subr.mxu0 0.0
    %1035 = vmatpush1.msra.mxu0 0.0
    %1036 = vmatprep.subr.mxu0 0.0
    %1037 = vmatpush1.msra.mxu0 0.0
    %1038 = vmatprep.subr.mxu0 0.0
    %1039 = vmatpush1.msra.mxu0 0.0
    %1040 = vmatprep.subr.mxu0 0.0
    %1041 = vmatpush1.msra.mxu0 0.0
    %1042 = vmatprep.subr.mxu0 0.0
    %1043 = vmatpush1.msra.mxu0 0.0
    %1044 = vmatprep.subr.mxu0 0.0
    %1045 = vmatpush1.msra.mxu0 0.0
    %1046 = vmatprep.subr.mxu0 0.0
    %1047 = vmatpush1.msra.mxu0 0.0
    %1048 = vmatprep.subr.mxu0 0.0
    %1049 = vmatpush1.msra.mxu0 0.0
    %1050 = vmatprep.subr.mxu0 0.0
    %1051 = vmatpush1.msra.mxu0 0.0
    %1052 = vmatprep.subr.mxu0 0.0
    %1053 = vmatpush1.msra.mxu0 0.0
    %1054 = vmatprep.subr.mxu0 0.0
    %1055 = vmatpush1.msra.mxu0 0.0
    %1056 = vmatprep.subr.mxu0 0.0
    %1057 = vmatpush1.msra.mxu0 0.0
    %1058 = vmatprep.subr.mxu0 0.0
    %1059 = vmatpush1.msra.mxu0 0.0
    %1060 = vmatprep.subr.mxu0 0.0
    %1061 = vmatpush1.msra.mxu0 0.0
    %1062 = vmatprep.subr.mxu0 0.0
    %1063 = vmatpush1.msra.mxu0 0.0
    %1064 = vmatprep.subr.mxu0 0.0
    %1065 = vmatpush1.msra.mxu0 0.0
    %1066 = vmatprep.subr.mxu0 0.0
    %1067 = vmatpush1.msra.mxu0 0.0
    %1068 = vmatprep.mubr.f32.mxu0 0.0
    %1069 = vmatmul.mubr.f32.gmra.mrb[0].mxu0 %v1002
    %v1070 = vpop.f32.mrb[0].mxu0
    %v1071 = vadd.f32 %v999, %v1070
    %v1072 = vpop.f32.mrb[0].mxu0
    %1073 = vdwg.mxu0
    %vm1074 = vcmp.ge.f32.partialorder %v1071, 0.0
    %v1075 = vmul.f32 %v1071, 0.01
    %v1076 = vsel %vm1074, %v1071, %v1075
    %v1077 = vld [vmem:[%s37] sm:$0xff]
    %v1078 = vld [vmem:[%s37 + $0x8] sm:$0xff]
    %v1079 = vld [vmem:[%s37 + $0x10] sm:$0xff]
    %v1080 = vld [vmem:[%s37 + $0x18] sm:$0x3f]
    %v1081 = vld [vmem:[%s39] sm:$0x1]
    %v1083 = vlaneseq
    %v1084 = vshrl.u32 %v1083, 7
    %v1085 = vsub.s32 0, %v1084
    %v1086 = vrot.slane %v1081, %v1085
    %vm1088 = vcmask 244736
    %v1090 = vsel %vm1088, %v1076, 0
    %v1093 = vsel %vm205, %v1080, 0
    %1095 = vmatprep.subr.mxu0 0.0
    %1096 = vmatpush1.msra.mxu0 %v1077
    %1097 = vmatprep.subr.mxu0 0.0
    %1098 = vmatpush1.msra.mxu0 %v1078
    %1099 = vmatprep.subr.mxu0 0.0
    %1100 = vmatpush1.msra.mxu0 %v1079
    %1101 = vmatprep.subr.mxu0 0.0
    %1102 = vmatpush1.msra.mxu0 %v1093
    %1103 = vmatprep.subr.mxu0 0.0
    %1104 = vmatpush1.msra.mxu0 0.0
    %1105 = vmatprep.subr.mxu0 0.0
    %1106 = vmatpush1.msra.mxu0 0.0
    %1107 = vmatprep.subr.mxu0 0.0
    %1108 = vmatpush1.msra.mxu0 0.0
    %1109 = vmatprep.subr.mxu0 0.0
    %1110 = vmatpush1.msra.mxu0 0.0
    %1111 = vmatprep.subr.mxu0 0.0
    %1112 = vmatpush1.msra.mxu0 0.0
    %1113 = vmatprep.subr.mxu0 0.0
    %1114 = vmatpush1.msra.mxu0 0.0
    %1115 = vmatprep.subr.mxu0 0.0
    %1116 = vmatpush1.msra.mxu0 0.0
    %1117 = vmatprep.subr.mxu0 0.0
    %1118 = vmatpush1.msra.mxu0 0.0
    %1119 = vmatprep.subr.mxu0 0.0
    %1120 = vmatpush1.msra.mxu0 0.0
    %1121 = vmatprep.subr.mxu0 0.0
    %1122 = vmatpush1.msra.mxu0 0.0
    %1123 = vmatprep.subr.mxu0 0.0
    %1124 = vmatpush1.msra.mxu0 0.0
    %1125 = vmatprep.subr.mxu0 0.0
    %1126 = vmatpush1.msra.mxu0 0.0
    %1127 = vmatprep.subr.mxu0 0.0
    %1128 = vmatpush1.msra.mxu0 0.0
    %1129 = vmatprep.subr.mxu0 0.0
    %1130 = vmatpush1.msra.mxu0 0.0
    %1131 = vmatprep.subr.mxu0 0.0
    %1132 = vmatpush1.msra.mxu0 0.0
    %1133 = vmatprep.subr.mxu0 0.0
    %1134 = vmatpush1.msra.mxu0 0.0
    %1135 = vmatprep.subr.mxu0 0.0
    %1136 = vmatpush1.msra.mxu0 0.0
    %1137 = vmatprep.subr.mxu0 0.0
    %1138 = vmatpush1.msra.mxu0 0.0
    %1139 = vmatprep.subr.mxu0 0.0
    %1140 = vmatpush1.msra.mxu0 0.0
    %1141 = vmatprep.subr.mxu0 0.0
    %1142 = vmatpush1.msra.mxu0 0.0
    %1143 = vmatprep.subr.mxu0 0.0
    %1144 = vmatpush1.msra.mxu0 0.0
    %1145 = vmatprep.subr.mxu0 0.0
    %1146 = vmatpush1.msra.mxu0 0.0
    %1147 = vmatprep.subr.mxu0 0.0
    %1148 = vmatpush1.msra.mxu0 0.0
    %1149 = vmatprep.subr.mxu0 0.0
    %1150 = vmatpush1.msra.mxu0 0.0
    %1151 = vmatprep.subr.mxu0 0.0
    %1152 = vmatpush1.msra.mxu0 0.0
    %1153 = vmatprep.subr.mxu0 0.0
    %1154 = vmatpush1.msra.mxu0 0.0
    %1155 = vmatprep.subr.mxu0 0.0
    %1156 = vmatpush1.msra.mxu0 0.0
    %1157 = vmatprep.subr.mxu0 0.0
    %1158 = vmatpush1.msra.mxu0 0.0
    %1159 = vmatprep.mubr.f32.mxu0 0.0
    %1160 = vmatmul.mubr.f32.gmra.mrb[0].mxu0 %v1090
    %v1161 = vpop.f32.mrb[0].mxu0
    %v1162 = vadd.f32 %v1086, %v1161
    %v1163 = vpop.f32.mrb[0].mxu0
    %1164 = vdwg.mxu0
    %v1165 = vld [vmem:[%s41] sm:$0xff]
    %v1166 = vld [vmem:[%s41 + $0x8] sm:$0xff]
    %v1167 = vld [vmem:[%s41 + $0x10] sm:$0xff]
    %v1168 = vld [vmem:[%s41 + $0x18] sm:$0x3f]
    %v1169 = vld [vmem:[%s43] sm:$0x1]
    %v1171 = vlaneseq
    %v1172 = vshrl.u32 %v1171, 7
    %v1173 = vsub.s32 0, %v1172
    %v1174 = vrot.slane %v1169, %v1173
    %v1177 = vsel %vm205, %v1168, 0
    %1179 = vmatprep.subr.mxu0 0.0
    %1180 = vmatpush1.msra.mxu0 %v1165
    %1181 = vmatprep.subr.mxu0 0.0
    %1182 = vmatpush1.msra.mxu0 %v1166
    %1183 = vmatprep.subr.mxu0 0.0
    %1184 = vmatpush1.msra.mxu0 %v1167
    %1185 = vmatprep.subr.mxu0 0.0
    %1186 = vmatpush1.msra.mxu0 %v1177
    %1187 = vmatprep.subr.mxu0 0.0
    %1188 = vmatpush1.msra.mxu0 0.0
    %1189 = vmatprep.subr.mxu0 0.0
    %1190 = vmatpush1.msra.mxu0 0.0
    %1191 = vmatprep.subr.mxu0 0.0
    %1192 = vmatpush1.msra.mxu0 0.0
    %1193 = vmatprep.subr.mxu0 0.0
    %1194 = vmatpush1.msra.mxu0 0.0
    %1195 = vmatprep.subr.mxu0 0.0
    %1196 = vmatpush1.msra.mxu0 0.0
    %1197 = vmatprep.subr.mxu0 0.0
    %1198 = vmatpush1.msra.mxu0 0.0
    %1199 = vmatprep.subr.mxu0 0.0
    %1200 = vmatpush1.msra.mxu0 0.0
    %1201 = vmatprep.subr.mxu0 0.0
    %1202 = vmatpush1.msra.mxu0 0.0
    %1203 = vmatprep.subr.mxu0 0.0
    %1204 = vmatpush1.msra.mxu0 0.0
    %1205 = vmatprep.subr.mxu0 0.0
    %1206 = vmatpush1.msra.mxu0 0.0
    %1207 = vmatprep.subr.mxu0 0.0
    %1208 = vmatpush1.msra.mxu0 0.0
    %1209 = vmatprep.subr.mxu0 0.0
    %1210 = vmatpush1.msra.mxu0 0.0
    %1211 = vmatprep.subr.mxu0 0.0
    %1212 = vmatpush1.msra.mxu0 0.0
    %1213 = vmatprep.subr.mxu0 0.0
    %1214 = vmatpush1.msra.mxu0 0.0
    %1215 = vmatprep.subr.mxu0 0.0
    %1216 = vmatpush1.msra.mxu0 0.0
    %1217 = vmatprep.subr.mxu0 0.0
    %1218 = vmatpush1.msra.mxu0 0.0
    %1219 = vmatprep.subr.mxu0 0.0
    %1220 = vmatpush1.msra.mxu0 0.0
    %1221 = vmatprep.subr.mxu0 0.0
    %1222 = vmatpush1.msra.mxu0 0.0
    %1223 = vmatprep.subr.mxu0 0.0
    %1224 = vmatpush1.msra.mxu0 0.0
    %1225 = vmatprep.subr.mxu0 0.0
    %1226 = vmatpush1.msra.mxu0 0.0
    %1227 = vmatprep.subr.mxu0 0.0
    %1228 = vmatpush1.msra.mxu0 0.0
    %1229 = vmatprep.subr.mxu0 0.0
    %1230 = vmatpush1.msra.mxu0 0.0
    %1231 = vmatprep.subr.mxu0 0.0
    %1232 = vmatpush1.msra.mxu0 0.0
    %1233 = vmatprep.subr.mxu0 0.0
    %1234 = vmatpush1.msra.mxu0 0.0
    %1235 = vmatprep.subr.mxu0 0.0
    %1236 = vmatpush1.msra.mxu0 0.0
    %1237 = vmatprep.subr.mxu0 0.0
    %1238 = vmatpush1.msra.mxu0 0.0
    %1239 = vmatprep.subr.mxu0 0.0
    %1240 = vmatpush1.msra.mxu0 0.0
    %1241 = vmatprep.subr.mxu0 0.0
    %1242 = vmatpush1.msra.mxu0 0.0
    %1243 = vmatprep.mubr.f32.mxu0 0.0
    %1244 = vmatmul.mubr.f32.gmra.mrb[0].mxu0 %v1090
    %v1245 = vpop.f32.mrb[0].mxu0
    %v1246 = vadd.f32 %v1174, %v1245
    %v1247 = vpop.f32.mrb[0].mxu0
    %1248 = vdwg.mxu0
    %v1249 = vld [vmem:[%s75] sm:$0xff]
    %v1250 = vmul.f32 %v891, 0.5
    %v1251 = vmul.f32 %v1250, 1.442695
    %v1252 = vpow.pop %v1251
    %v1253 = vmul.f32 %v1249, %v1252
    %v1254 = vadd.f32 %v809, %v1253
    %v1255 = vld [vmem:[%s77] sm:$0xff]
    %v1256 = vmul.f32 %v1246, 0.5
    %v1257 = vmul.f32 %v1256, 1.442695
    %v1258 = vpow.pop %v1257
    %v1259 = vmul.f32 %v1255, %v1258
    %v1260 = vadd.f32 %v1162, %v1259
    %v1261 = vld [vmem:[%s45] sm:$0xff]
    %v1262 = vld [vmem:[%s45 + $0x8] sm:$0x3]
    %v1263 = vld [vmem:[%s47] sm:$0xff]
    %v1264 = vld [vmem:[%s47 + $0x8] sm:$0x3]
    %vm1265 = vcmask 80896
    %v1267 = vsel %vm1265, %v1260, 0
    %v1270 = vsel %vm912, %v1264, 0
    %1272 = vmatprep.subr.mxu0 0.0
    %1273 = vmatpush1.msra.mxu0 %v1263
    %1274 = vmatprep.subr.mxu0 0.0
    %1275 = vmatpush1.msra.mxu0 %v1270
    %1276 = vmatprep.subr.mxu0 0.0
    %1277 = vmatpush1.msra.mxu0 0.0
    %1278 = vmatprep.subr.mxu0 0.0
    %1279 = vmatpush1.msra.mxu0 0.0
    %1280 = vmatprep.subr.mxu0 0.0
    %1281 = vmatpush1.msra.mxu0 0.0
    %1282 = vmatprep.subr.mxu0 0.0
    %1283 = vmatpush1.msra.mxu0 0.0
    %1284 = vmatprep.subr.mxu0 0.0
    %1285 = vmatpush1.msra.mxu0 0.0
    %1286 = vmatprep.subr.mxu0 0.0
    %1287 = vmatpush1.msra.mxu0 0.0
    %1288 = vmatprep.subr.mxu0 0.0
    %1289 = vmatpush1.msra.mxu0 0.0
    %1290 = vmatprep.subr.mxu0 0.0
    %1291 = vmatpush1.msra.mxu0 0.0
    %1292 = vmatprep.subr.mxu0 0.0
    %1293 = vmatpush1.msra.mxu0 0.0
    %1294 = vmatprep.subr.mxu0 0.0
    %1295 = vmatpush1.msra.mxu0 0.0
    %1296 = vmatprep.subr.mxu0 0.0
    %1297 = vmatpush1.msra.mxu0 0.0
    %1298 = vmatprep.subr.mxu0 0.0
    %1299 = vmatpush1.msra.mxu0 0.0
    %1300 = vmatprep.subr.mxu0 0.0
    %1301 = vmatpush1.msra.mxu0 0.0
    %1302 = vmatprep.subr.mxu0 0.0
    %1303 = vmatpush1.msra.mxu0 0.0
    %1304 = vmatprep.subr.mxu0 0.0
    %1305 = vmatpush1.msra.mxu0 0.0
    %1306 = vmatprep.subr.mxu0 0.0
    %1307 = vmatpush1.msra.mxu0 0.0
    %1308 = vmatprep.subr.mxu0 0.0
    %1309 = vmatpush1.msra.mxu0 0.0
    %1310 = vmatprep.subr.mxu0 0.0
    %1311 = vmatpush1.msra.mxu0 0.0
    %1312 = vmatprep.subr.mxu0 0.0
    %1313 = vmatpush1.msra.mxu0 0.0
    %1314 = vmatprep.subr.mxu0 0.0
    %1315 = vmatpush1.msra.mxu0 0.0
    %1316 = vmatprep.subr.mxu0 0.0
    %1317 = vmatpush1.msra.mxu0 0.0
    %1318 = vmatprep.subr.mxu0 0.0
    %1319 = vmatpush1.msra.mxu0 0.0
    %1320 = vmatprep.subr.mxu0 0.0
    %1321 = vmatpush1.msra.mxu0 0.0
    %1322 = vmatprep.subr.mxu0 0.0
    %1323 = vmatpush1.msra.mxu0 0.0
    %1324 = vmatprep.subr.mxu0 0.0
    %1325 = vmatpush1.msra.mxu0 0.0
    %1326 = vmatprep.subr.mxu0 0.0
    %1327 = vmatpush1.msra.mxu0 0.0
    %1328 = vmatprep.subr.mxu0 0.0
    %1329 = vmatpush1.msra.mxu0 0.0
    %1330 = vmatprep.subr.mxu0 0.0
    %1331 = vmatpush1.msra.mxu0 0.0
    %1332 = vmatprep.subr.mxu0 0.0
    %1333 = vmatpush1.msra.mxu0 0.0
    %1334 = vmatprep.subr.mxu0 0.0
    %1335 = vmatpush1.msra.mxu0 0.0
    %1336 = vmatprep.mubr.f32.mxu0 0.0
    %1337 = vmatmul.mubr.f32.gmra.mrb[0].mxu0 %v1267
    %v1338 = vpop.f32.mrb[0].mxu0
    %v1339 = vadd.f32 0.0, %v1338
    %v1340 = vpop.f32.mrb[0].mxu0
    %1341 = vdwg.mxu0
    %v1343 = vsel %vm1265, %v1254, 0
    %v1346 = vsel %vm912, %v1262, 0
    %1348 = vmatprep.subr.mxu0 0.0
    %1349 = vmatpush1.msra.mxu0 %v1261
    %1350 = vmatprep.subr.mxu0 0.0
    %1351 = vmatpush1.msra.mxu0 %v1346
    %1352 = vmatprep.subr.mxu0 0.0
    %1353 = vmatpush1.msra.mxu0 0.0
    %1354 = vmatprep.subr.mxu0 0.0
    %1355 = vmatpush1.msra.mxu0 0.0
    %1356 = vmatprep.subr.mxu0 0.0
    %1357 = vmatpush1.msra.mxu0 0.0
    %1358 = vmatprep.subr.mxu0 0.0
    %1359 = vmatpush1.msra.mxu0 0.0
    %1360 = vmatprep.subr.mxu0 0.0
    %1361 = vmatpush1.msra.mxu0 0.0
    %1362 = vmatprep.subr.mxu0 0.0
    %1363 = vmatpush1.msra.mxu0 0.0
    %1364 = vmatprep.subr.mxu0 0.0
    %1365 = vmatpush1.msra.mxu0 0.0
    %1366 = vmatprep.subr.mxu0 0.0
    %1367 = vmatpush1.msra.mxu0 0.0
    %1368 = vmatprep.subr.mxu0 0.0
    %1369 = vmatpush1.msra.mxu0 0.0
    %1370 = vmatprep.subr.mxu0 0.0
    %1371 = vmatpush1.msra.mxu0 0.0
    %1372 = vmatprep.subr.mxu0 0.0
    %1373 = vmatpush1.msra.mxu0 0.0
    %1374 = vmatprep.subr.mxu0 0.0
    %1375 = vmatpush1.msra.mxu0 0.0
    %1376 = vmatprep.subr.mxu0 0.0
    %1377 = vmatpush1.msra.mxu0 0.0
    %1378 = vmatprep.subr.mxu0 0.0
    %1379 = vmatpush1.msra.mxu0 0.0
    %1380 = vmatprep.subr.mxu0 0.0
    %1381 = vmatpush1.msra.mxu0 0.0
    %1382 = vmatprep.subr.mxu0 0.0
    %1383 = vmatpush1.msra.mxu0 0.0
    %1384 = vmatprep.subr.mxu0 0.0
    %1385 = vmatpush1.msra.mxu0 0.0
    %1386 = vmatprep.subr.mxu0 0.0
    %1387 = vmatpush1.msra.mxu0 0.0
    %1388 = vmatprep.subr.mxu0 0.0
    %1389 = vmatpush1.msra.mxu0 0.0
    %1390 = vmatprep.subr.mxu0 0.0
    %1391 = vmatpush1.msra.mxu0 0.0
    %1392 = vmatprep.subr.mxu0 0.0
    %1393 = vmatpush1.msra.mxu0 0.0
    %1394 = vmatprep.subr.mxu0 0.0
    %1395 = vmatpush1.msra.mxu0 0.0
    %1396 = vmatprep.subr.mxu0 0.0
    %1397 = vmatpush1.msra.mxu0 0.0
    %1398 = vmatprep.subr.mxu0 0.0
    %1399 = vmatpush1.msra.mxu0 0.0
    %1400 = vmatprep.subr.mxu0 0.0
    %1401 = vmatpush1.msra.mxu0 0.0
    %1402 = vmatprep.subr.mxu0 0.0
    %1403 = vmatpush1.msra.mxu0 0.0
    %1404 = vmatprep.subr.mxu0 0.0
    %1405 = vmatpush1.msra.mxu0 0.0
    %1406 = vmatprep.subr.mxu0 0.0
    %1407 = vmatpush1.msra.mxu0 0.0
    %1408 = vmatprep.subr.mxu0 0.0
    %1409 = vmatpush1.msra.mxu0 0.0
    %1410 = vmatprep.subr.mxu0 0.0
    %1411 = vmatpush1.msra.mxu0 0.0
    %1412 = vmatprep.mubr.f32.mxu0 0.0
    %1413 = vmatmul.mubr.f32.gmra.mrb[0].mxu0 %v1343
    %v1414 = vpop.f32.mrb[0].mxu0
    %v1415 = vadd.f32 %v1339, %v1414
    %v1416 = vpop.f32.mrb[0].mxu0
    %1417 = vdwg.mxu0
    %v1418 = vld [vmem:[%s49] sm:$0x1]
    %v1420 = vlaneseq
    %v1421 = vshrl.u32 %v1420, 7
    %v1422 = vsub.s32 0, %v1421
    %v1423 = vrot.slane %v1418, %v1422
    %v1425 = vadd.f32 %v1415, %v1423
    %v1426 = vmax.f32 %v1425, 0.0
    %v1427 = vld [vmem:[%s51] sm:$0xff]
    %v1428 = vld [vmem:[%s51 + $0x8] sm:$0xff]
    %v1429 = vld [vmem:[%s51 + $0x10] sm:$0xf]
    %v1430 = vld [vmem:[%s53] sm:$0x1]
    %v1432 = vlaneseq
    %v1433 = vshrl.u32 %v1432, 7
    %v1434 = vsub.s32 0, %v1433
    %v1435 = vrot.slane %v1430, %v1434
    %vm1437 = vcmask 162816
    %v1439 = vsel %vm1437, %v1426, 0
    %v1442 = vsel %vm553, %v1429, 0
    %1444 = vmatprep.subr.mxu0 0.0
    %1445 = vmatpush1.msra.mxu0 %v1427
    %1446 = vmatprep.subr.mxu0 0.0
    %1447 = vmatpush1.msra.mxu0 %v1428
    %1448 = vmatprep.subr.mxu0 0.0
    %1449 = vmatpush1.msra.mxu0 %v1442
    %1450 = vmatprep.subr.mxu0 0.0
    %1451 = vmatpush1.msra.mxu0 0.0
    %1452 = vmatprep.subr.mxu0 0.0
    %1453 = vmatpush1.msra.mxu0 0.0
    %1454 = vmatprep.subr.mxu0 0.0
    %1455 = vmatpush1.msra.mxu0 0.0
    %1456 = vmatprep.subr.mxu0 0.0
    %1457 = vmatpush1.msra.mxu0 0.0
    %1458 = vmatprep.subr.mxu0 0.0
    %1459 = vmatpush1.msra.mxu0 0.0
    %1460 = vmatprep.subr.mxu0 0.0
    %1461 = vmatpush1.msra.mxu0 0.0
    %1462 = vmatprep.subr.mxu0 0.0
    %1463 = vmatpush1.msra.mxu0 0.0
    %1464 = vmatprep.subr.mxu0 0.0
    %1465 = vmatpush1.msra.mxu0 0.0
    %1466 = vmatprep.subr.mxu0 0.0
    %1467 = vmatpush1.msra.mxu0 0.0
    %1468 = vmatprep.subr.mxu0 0.0
    %1469 = vmatpush1.msra.mxu0 0.0
    %1470 = vmatprep.subr.mxu0 0.0
    %1471 = vmatpush1.msra.mxu0 0.0
    %1472 = vmatprep.subr.mxu0 0.0
    %1473 = vmatpush1.msra.mxu0 0.0
    %1474 = vmatprep.subr.mxu0 0.0
    %1475 = vmatpush1.msra.mxu0 0.0
    %1476 = vmatprep.subr.mxu0 0.0
    %1477 = vmatpush1.msra.mxu0 0.0
    %1478 = vmatprep.subr.mxu0 0.0
    %1479 = vmatpush1.msra.mxu0 0.0
    %1480 = vmatprep.subr.mxu0 0.0
    %1481 = vmatpush1.msra.mxu0 0.0
    %1482 = vmatprep.subr.mxu0 0.0
    %1483 = vmatpush1.msra.mxu0 0.0
    %1484 = vmatprep.subr.mxu0 0.0
    %1485 = vmatpush1.msra.mxu0 0.0
    %1486 = vmatprep.subr.mxu0 0.0
    %1487 = vmatpush1.msra.mxu0 0.0
    %1488 = vmatprep.subr.mxu0 0.0
    %1489 = vmatpush1.msra.mxu0 0.0
    %1490 = vmatprep.subr.mxu0 0.0
    %1491 = vmatpush1.msra.mxu0 0.0
    %1492 = vmatprep.subr.mxu0 0.0
    %1493 = vmatpush1.msra.mxu0 0.0
    %1494 = vmatprep.subr.mxu0 0.0
    %1495 = vmatpush1.msra.mxu0 0.0
    %1496 = vmatprep.subr.mxu0 0.0
    %1497 = vmatpush1.msra.mxu0 0.0
    %1498 = vmatprep.subr.mxu0 0.0
    %1499 = vmatpush1.msra.mxu0 0.0
    %1500 = vmatprep.subr.mxu0 0.0
    %1501 = vmatpush1.msra.mxu0 0.0
    %1502 = vmatprep.subr.mxu0 0.0
    %1503 = vmatpush1.msra.mxu0 0.0
    %1504 = vmatprep.subr.mxu0 0.0
    %1505 = vmatpush1.msra.mxu0 0.0
    %1506 = vmatprep.subr.mxu0 0.0
    %1507 = vmatpush1.msra.mxu0 0.0
    %1508 = vmatprep.mubr.f32.mxu0 0.0
    %1509 = vmatmul.mubr.f32.gmra.mrb[0].mxu0 %v1439
    %v1510 = vpop.f32.mrb[0].mxu0
    %v1511 = vadd.f32 %v1435, %v1510
    %v1512 = vpop.f32.mrb[0].mxu0
    %1513 = vdwg.mxu0
    %vm1514 = vcmp.ge.f32.partialorder %v1511, 0.0
    %v1515 = vmul.f32 %v1511, 0.01
    %v1516 = vsel %vm1514, %v1511, %v1515
    %v1517 = vld [vmem:[%s55] sm:$0xff]
    %v1518 = vld [vmem:[%s55 + $0x8] sm:$0xff]
    %v1519 = vld [vmem:[%s55 + $0x10] sm:$0xff]
    %v1520 = vld [vmem:[%s55 + $0x18] sm:$0xff]
    %v1521 = vld [vmem:[%s55 + $0x20] sm:$0xff]
    %v1522 = vld [vmem:[%s57] sm:$0x1]
    %v1524 = vlaneseq
    %v1525 = vshrl.u32 %v1524, 7
    %v1526 = vsub.s32 0, %v1525
    %v1527 = vrot.slane %v1522, %v1526
    %v1530 = vsel %vm738, %v1516, 0
    %1532 = vmatprep.subr.mxu0 0.0
    %1533 = vmatpush1.msra.mxu0 %v1517
    %1534 = vmatprep.subr.mxu0 0.0
    %1535 = vmatpush1.msra.mxu0 %v1518
    %1536 = vmatprep.subr.mxu0 0.0
    %1537 = vmatpush1.msra.mxu0 %v1519
    %1538 = vmatprep.subr.mxu0 0.0
    %1539 = vmatpush1.msra.mxu0 %v1520
    %1540 = vmatprep.subr.mxu0 0.0
    %1541 = vmatpush1.msra.mxu0 %v1521
    %1542 = vmatprep.subr.mxu0 0.0
    %1543 = vmatpush1.msra.mxu0 0.0
    %1544 = vmatprep.subr.mxu0 0.0
    %1545 = vmatpush1.msra.mxu0 0.0
    %1546 = vmatprep.subr.mxu0 0.0
    %1547 = vmatpush1.msra.mxu0 0.0
    %1548 = vmatprep.subr.mxu0 0.0
    %1549 = vmatpush1.msra.mxu0 0.0
    %1550 = vmatprep.subr.mxu0 0.0
    %1551 = vmatpush1.msra.mxu0 0.0
    %1552 = vmatprep.subr.mxu0 0.0
    %1553 = vmatpush1.msra.mxu0 0.0
    %1554 = vmatprep.subr.mxu0 0.0
    %1555 = vmatpush1.msra.mxu0 0.0
    %1556 = vmatprep.subr.mxu0 0.0
    %1557 = vmatpush1.msra.mxu0 0.0
    %1558 = vmatprep.subr.mxu0 0.0
    %1559 = vmatpush1.msra.mxu0 0.0
    %1560 = vmatprep.subr.mxu0 0.0
    %1561 = vmatpush1.msra.mxu0 0.0
    %1562 = vmatprep.subr.mxu0 0.0
    %1563 = vmatpush1.msra.mxu0 0.0
    %1564 = vmatprep.subr.mxu0 0.0
    %1565 = vmatpush1.msra.mxu0 0.0
    %1566 = vmatprep.subr.mxu0 0.0
    %1567 = vmatpush1.msra.mxu0 0.0
    %1568 = vmatprep.subr.mxu0 0.0
    %1569 = vmatpush1.msra.mxu0 0.0
    %1570 = vmatprep.subr.mxu0 0.0
    %1571 = vmatpush1.msra.mxu0 0.0
    %1572 = vmatprep.subr.mxu0 0.0
    %1573 = vmatpush1.msra.mxu0 0.0
    %1574 = vmatprep.subr.mxu0 0.0
    %1575 = vmatpush1.msra.mxu0 0.0
    %1576 = vmatprep.subr.mxu0 0.0
    %1577 = vmatpush1.msra.mxu0 0.0
    %1578 = vmatprep.subr.mxu0 0.0
    %1579 = vmatpush1.msra.mxu0 0.0
    %1580 = vmatprep.subr.mxu0 0.0
    %1581 = vmatpush1.msra.mxu0 0.0
    %1582 = vmatprep.subr.mxu0 0.0
    %1583 = vmatpush1.msra.mxu0 0.0
    %1584 = vmatprep.subr.mxu0 0.0
    %1585 = vmatpush1.msra.mxu0 0.0
    %1586 = vmatprep.subr.mxu0 0.0
    %1587 = vmatpush1.msra.mxu0 0.0
    %1588 = vmatprep.subr.mxu0 0.0
    %1589 = vmatpush1.msra.mxu0 0.0
    %1590 = vmatprep.subr.mxu0 0.0
    %1591 = vmatpush1.msra.mxu0 0.0
    %1592 = vmatprep.subr.mxu0 0.0
    %1593 = vmatpush1.msra.mxu0 0.0
    %1594 = vmatprep.subr.mxu0 0.0
    %1595 = vmatpush1.msra.mxu0 0.0
    %1596 = vmatprep.mubr.f32.mxu0 0.0
    %1597 = vmatmul.mubr.f32.gmra.mrb[0].mxu0 %v1530
    %v1598 = vpop.f32.mrb[0].mxu0
    %v1599 = vadd.f32 %v1527, %v1598
    %v1600 = vpop.f32.mrb[0].mxu0
    %1601 = vdwg.mxu0
    %vm1602 = vcmp.ge.f32.partialorder %v1599, 0.0
    %v1603 = vmul.f32 %v1599, 0.01
    %v1604 = vsel %vm1602, %v1599, %v1603
    %v1605 = vld [vmem:[%s59] sm:$0xff]
    %v1606 = vld [vmem:[%s59 + $0x8] sm:$0xff]
    %v1607 = vld [vmem:[%s59 + $0x10] sm:$0xff]
    %v1608 = vld [vmem:[%s59 + $0x18] sm:$0xff]
    %v1609 = vld [vmem:[%s59 + $0x20] sm:$0xff]
    %v1610 = vld [vmem:[%s59 + $0x28] sm:$0xff]
    %v1611 = vld [vmem:[%s59 + $0x30] sm:$0xff]
    %v1612 = vld [vmem:[%s59 + $0x38] sm:$0xff]
    %v1613 = vld [vmem:[%s59 + $0x40] sm:$0x3f]
    %v1614 = vld [vmem:[%s61] sm:$0x1]
    %v1616 = vlaneseq
    %v1617 = vshrl.u32 %v1616, 7
    %v1618 = vsub.s32 0, %v1617
    %v1619 = vrot.slane %v1614, %v1618
    %v1622 = vsel %vm646, %v1604, 0
    %v1625 = vsel %vm205, %v1613, 0
    %1627 = vmatprep.subr.mxu0 0.0
    %1628 = vmatpush1.msra.mxu0 %v1605
    %1629 = vmatprep.subr.mxu0 0.0
    %1630 = vmatpush1.msra.mxu0 %v1606
    %1631 = vmatprep.subr.mxu0 0.0
    %1632 = vmatpush1.msra.mxu0 %v1607
    %1633 = vmatprep.subr.mxu0 0.0
    %1634 = vmatpush1.msra.mxu0 %v1608
    %1635 = vmatprep.subr.mxu0 0.0
    %1636 = vmatpush1.msra.mxu0 %v1609
    %1637 = vmatprep.subr.mxu0 0.0
    %1638 = vmatpush1.msra.mxu0 %v1610
    %1639 = vmatprep.subr.mxu0 0.0
    %1640 = vmatpush1.msra.mxu0 %v1611
    %1641 = vmatprep.subr.mxu0 0.0
    %1642 = vmatpush1.msra.mxu0 %v1612
    %1643 = vmatprep.subr.mxu0 0.0
    %1644 = vmatpush1.msra.mxu0 %v1625
    %1645 = vmatprep.subr.mxu0 0.0
    %1646 = vmatpush1.msra.mxu0 0.0
    %1647 = vmatprep.subr.mxu0 0.0
    %1648 = vmatpush1.msra.mxu0 0.0
    %1649 = vmatprep.subr.mxu0 0.0
    %1650 = vmatpush1.msra.mxu0 0.0
    %1651 = vmatprep.subr.mxu0 0.0
    %1652 = vmatpush1.msra.mxu0 0.0
    %1653 = vmatprep.subr.mxu0 0.0
    %1654 = vmatpush1.msra.mxu0 0.0
    %1655 = vmatprep.subr.mxu0 0.0
    %1656 = vmatpush1.msra.mxu0 0.0
    %1657 = vmatprep.subr.mxu0 0.0
    %1658 = vmatpush1.msra.mxu0 0.0
    %1659 = vmatprep.subr.mxu0 0.0
    %1660 = vmatpush1.msra.mxu0 0.0
    %1661 = vmatprep.subr.mxu0 0.0
    %1662 = vmatpush1.msra.mxu0 0.0
    %1663 = vmatprep.subr.mxu0 0.0
    %1664 = vmatpush1.msra.mxu0 0.0
    %1665 = vmatprep.subr.mxu0 0.0
    %1666 = vmatpush1.msra.mxu0 0.0
    %1667 = vmatprep.subr.mxu0 0.0
    %1668 = vmatpush1.msra.mxu0 0.0
    %1669 = vmatprep.subr.mxu0 0.0
    %1670 = vmatpush1.msra.mxu0 0.0
    %1671 = vmatprep.subr.mxu0 0.0
    %1672 = vmatpush1.msra.mxu0 0.0
    %1673 = vmatprep.subr.mxu0 0.0
    %1674 = vmatpush1.msra.mxu0 0.0
    %1675 = vmatprep.subr.mxu0 0.0
    %1676 = vmatpush1.msra.mxu0 0.0
    %1677 = vmatprep.subr.mxu0 0.0
    %1678 = vmatpush1.msra.mxu0 0.0
    %1679 = vmatprep.subr.mxu0 0.0
    %1680 = vmatpush1.msra.mxu0 0.0
    %1681 = vmatprep.subr.mxu0 0.0
    %1682 = vmatpush1.msra.mxu0 0.0
    %1683 = vmatprep.subr.mxu0 0.0
    %1684 = vmatpush1.msra.mxu0 0.0
    %1685 = vmatprep.subr.mxu0 0.0
    %1686 = vmatpush1.msra.mxu0 0.0
    %1687 = vmatprep.subr.mxu0 0.0
    %1688 = vmatpush1.msra.mxu0 0.0
    %1689 = vmatprep.subr.mxu0 0.0
    %1690 = vmatpush1.msra.mxu0 0.0
    %1691 = vmatprep.mubr.f32.mxu0 0.0
    %1692 = vmatmul.mubr.f32.gmra.mrb[0].mxu0 %v1622
    %v1693 = vpop.f32.mrb[0].mxu0
    %v1694 = vadd.f32 %v1619, %v1693
    %v1695 = vpop.f32.mrb[0].mxu0
    %1696 = vdwg.mxu0
    %v1697 = vxor.u32 %v1694, 2147483648
    %v1698 = vmul.f32 %v1697, 1.442695
    %v1699 = vpow.pop %v1698
    %v1700 = vadd.f32 %v1699, 1.0
    %v1701 = vrcp.pop %v1700
    %v1702 = vmul.f32 1.0, %v1701
    %1703 = vst.msk [vmem:[#allocation2] sm:$0xff] %vm549, %v1702
    %v1704 = vld [vmem:[%s63] sm:$0xff]
    %v1705 = vld [vmem:[%s63 + $0x8] sm:$0xff]
    %v1706 = vld [vmem:[%s63 + $0x10] sm:$0xf]
    %v1707 = vld [vmem:[%s65] sm:$0x1]
    %v1709 = vlaneseq
    %v1710 = vshrl.u32 %v1709, 7
    %v1711 = vsub.s32 0, %v1710
    %v1712 = vrot.slane %v1707, %v1711
    %v1715 = vsel %vm553, %v1706, 0
    %1717 = vmatprep.subr.mxu0 0.0
    %1718 = vmatpush1.msra.mxu0 %v1704
    %1719 = vmatprep.subr.mxu0 0.0
    %1720 = vmatpush1.msra.mxu0 %v1705
    %1721 = vmatprep.subr.mxu0 0.0
    %1722 = vmatpush1.msra.mxu0 %v1715
    %1723 = vmatprep.subr.mxu0 0.0
    %1724 = vmatpush1.msra.mxu0 0.0
    %1725 = vmatprep.subr.mxu0 0.0
    %1726 = vmatpush1.msra.mxu0 0.0
    %1727 = vmatprep.subr.mxu0 0.0
    %1728 = vmatpush1.msra.mxu0 0.0
    %1729 = vmatprep.subr.mxu0 0.0
    %1730 = vmatpush1.msra.mxu0 0.0
    %1731 = vmatprep.subr.mxu0 0.0
    %1732 = vmatpush1.msra.mxu0 0.0
    %1733 = vmatprep.subr.mxu0 0.0
    %1734 = vmatpush1.msra.mxu0 0.0
    %1735 = vmatprep.subr.mxu0 0.0
    %1736 = vmatpush1.msra.mxu0 0.0
    %1737 = vmatprep.subr.mxu0 0.0
    %1738 = vmatpush1.msra.mxu0 0.0
    %1739 = vmatprep.subr.mxu0 0.0
    %1740 = vmatpush1.msra.mxu0 0.0
    %1741 = vmatprep.subr.mxu0 0.0
    %1742 = vmatpush1.msra.mxu0 0.0
    %1743 = vmatprep.subr.mxu0 0.0
    %1744 = vmatpush1.msra.mxu0 0.0
    %1745 = vmatprep.subr.mxu0 0.0
    %1746 = vmatpush1.msra.mxu0 0.0
    %1747 = vmatprep.subr.mxu0 0.0
    %1748 = vmatpush1.msra.mxu0 0.0
    %1749 = vmatprep.subr.mxu0 0.0
    %1750 = vmatpush1.msra.mxu0 0.0
    %1751 = vmatprep.subr.mxu0 0.0
    %1752 = vmatpush1.msra.mxu0 0.0
    %1753 = vmatprep.subr.mxu0 0.0
    %1754 = vmatpush1.msra.mxu0 0.0
    %1755 = vmatprep.subr.mxu0 0.0
    %1756 = vmatpush1.msra.mxu0 0.0
    %1757 = vmatprep.subr.mxu0 0.0
    %1758 = vmatpush1.msra.mxu0 0.0
    %1759 = vmatprep.subr.mxu0 0.0
    %1760 = vmatpush1.msra.mxu0 0.0
    %1761 = vmatprep.subr.mxu0 0.0
    %1762 = vmatpush1.msra.mxu0 0.0
    %1763 = vmatprep.subr.mxu0 0.0
    %1764 = vmatpush1.msra.mxu0 0.0
    %1765 = vmatprep.subr.mxu0 0.0
    %1766 = vmatpush1.msra.mxu0 0.0
    %1767 = vmatprep.subr.mxu0 0.0
    %1768 = vmatpush1.msra.mxu0 0.0
    %1769 = vmatprep.subr.mxu0 0.0
    %1770 = vmatpush1.msra.mxu0 0.0
    %1771 = vmatprep.subr.mxu0 0.0
    %1772 = vmatpush1.msra.mxu0 0.0
    %1773 = vmatprep.subr.mxu0 0.0
    %1774 = vmatpush1.msra.mxu0 0.0
    %1775 = vmatprep.subr.mxu0 0.0
    %1776 = vmatpush1.msra.mxu0 0.0
    %1777 = vmatprep.subr.mxu0 0.0
    %1778 = vmatpush1.msra.mxu0 0.0
    %1779 = vmatprep.subr.mxu0 0.0
    %1780 = vmatpush1.msra.mxu0 0.0
    %1781 = vmatprep.mubr.f32.mxu0 0.0
    %1782 = vmatmul.mubr.f32.gmra.mrb[0].mxu0 %v1439
    %v1783 = vpop.f32.mrb[0].mxu0
    %v1784 = vadd.f32 %v1712, %v1783
    %v1785 = vpop.f32.mrb[0].mxu0
    %1786 = vdwg.mxu0
    %vm1787 = vcmp.ge.f32.partialorder %v1784, 0.0
    %v1788 = vmul.f32 %v1784, 0.01
    %v1789 = vsel %vm1787, %v1784, %v1788
    %v1790 = vld [vmem:[%s67] sm:$0xff]
    %v1791 = vld [vmem:[%s67 + $0x8] sm:$0xff]
    %v1792 = vld [vmem:[%s67 + $0x10] sm:$0xff]
    %v1793 = vld [vmem:[%s67 + $0x18] sm:$0x3f]
    %v1794 = vld [vmem:[%s69] sm:$0x1]
    %v1796 = vlaneseq
    %v1797 = vshrl.u32 %v1796, 7
    %v1798 = vsub.s32 0, %v1797
    %v1799 = vrot.slane %v1794, %v1798
    %v1802 = vsel %vm1088, %v1789, 0
    %v1805 = vsel %vm205, %v1793, 0
    %1807 = vmatprep.subr.mxu0 0.0
    %1808 = vmatpush1.msra.mxu0 %v1790
    %1809 = vmatprep.subr.mxu0 0.0
    %1810 = vmatpush1.msra.mxu0 %v1791
    %1811 = vmatprep.subr.mxu0 0.0
    %1812 = vmatpush1.msra.mxu0 %v1792
    %1813 = vmatprep.subr.mxu0 0.0
    %1814 = vmatpush1.msra.mxu0 %v1805
    %1815 = vmatprep.subr.mxu0 0.0
    %1816 = vmatpush1.msra.mxu0 0.0
    %1817 = vmatprep.subr.mxu0 0.0
    %1818 = vmatpush1.msra.mxu0 0.0
    %1819 = vmatprep.subr.mxu0 0.0
    %1820 = vmatpush1.msra.mxu0 0.0
    %1821 = vmatprep.subr.mxu0 0.0
    %1822 = vmatpush1.msra.mxu0 0.0
    %1823 = vmatprep.subr.mxu0 0.0
    %1824 = vmatpush1.msra.mxu0 0.0
    %1825 = vmatprep.subr.mxu0 0.0
    %1826 = vmatpush1.msra.mxu0 0.0
    %1827 = vmatprep.subr.mxu0 0.0
    %1828 = vmatpush1.msra.mxu0 0.0
    %1829 = vmatprep.subr.mxu0 0.0
    %1830 = vmatpush1.msra.mxu0 0.0
    %1831 = vmatprep.subr.mxu0 0.0
    %1832 = vmatpush1.msra.mxu0 0.0
    %1833 = vmatprep.subr.mxu0 0.0
    %1834 = vmatpush1.msra.mxu0 0.0
    %1835 = vmatprep.subr.mxu0 0.0
    %1836 = vmatpush1.msra.mxu0 0.0
    %1837 = vmatprep.subr.mxu0 0.0
    %1838 = vmatpush1.msra.mxu0 0.0
    %1839 = vmatprep.subr.mxu0 0.0
    %1840 = vmatpush1.msra.mxu0 0.0
    %1841 = vmatprep.subr.mxu0 0.0
    %1842 = vmatpush1.msra.mxu0 0.0
    %1843 = vmatprep.subr.mxu0 0.0
    %1844 = vmatpush1.msra.mxu0 0.0
    %1845 = vmatprep.subr.mxu0 0.0
    %1846 = vmatpush1.msra.mxu0 0.0
    %1847 = vmatprep.subr.mxu0 0.0
    %1848 = vmatpush1.msra.mxu0 0.0
    %1849 = vmatprep.subr.mxu0 0.0
    %1850 = vmatpush1.msra.mxu0 0.0
    %1851 = vmatprep.subr.mxu0 0.0
    %1852 = vmatpush1.msra.mxu0 0.0
    %1853 = vmatprep.subr.mxu0 0.0
    %1854 = vmatpush1.msra.mxu0 0.0
    %1855 = vmatprep.subr.mxu0 0.0
    %1856 = vmatpush1.msra.mxu0 0.0
    %1857 = vmatprep.subr.mxu0 0.0
    %1858 = vmatpush1.msra.mxu0 0.0
    %1859 = vmatprep.subr.mxu0 0.0
    %1860 = vmatpush1.msra.mxu0 0.0
    %1861 = vmatprep.subr.mxu0 0.0
    %1862 = vmatpush1.msra.mxu0 0.0
    %1863 = vmatprep.subr.mxu0 0.0
    %1864 = vmatpush1.msra.mxu0 0.0
    %1865 = vmatprep.subr.mxu0 0.0
    %1866 = vmatpush1.msra.mxu0 0.0
    %1867 = vmatprep.subr.mxu0 0.0
    %1868 = vmatpush1.msra.mxu0 0.0
    %1869 = vmatprep.subr.mxu0 0.0
    %1870 = vmatpush1.msra.mxu0 0.0
    %1871 = vmatprep.mubr.f32.mxu0 0.0
    %1872 = vmatmul.mubr.f32.gmra.mrb[0].mxu0 %v1802
    %v1873 = vpop.f32.mrb[0].mxu0
    %v1874 = vadd.f32 %v1799, %v1873
    %v1875 = vpop.f32.mrb[0].mxu0
    %1876 = vdwg.mxu0
    %vm1877 = vcmp.ge.f32.partialorder %v1874, 0.0
    %v1878 = vmul.f32 %v1874, 0.01
    %v1879 = vsel %vm1877, %v1874, %v1878
    %v1880 = vld [vmem:[%s71] sm:$0xff]
    %v1881 = vld [vmem:[%s71 + $0x8] sm:$0xff]
    %v1882 = vld [vmem:[%s71 + $0x10] sm:$0xff]
    %v1883 = vld [vmem:[%s71 + $0x18] sm:$0xff]
    %v1884 = vld [vmem:[%s71 + $0x20] sm:$0xff]
    %v1885 = vld [vmem:[%s73] sm:$0x1]
    %v1887 = vlaneseq
    %v1888 = vshrl.u32 %v1887, 7
    %v1889 = vsub.s32 0, %v1888
    %v1890 = vrot.slane %v1885, %v1889
    %v1893 = vsel %vm738, %v1879, 0
    %1895 = vmatprep.subr.mxu0 0.0
    %1896 = vmatpush1.msra.mxu0 %v1880
    %1897 = vmatprep.subr.mxu0 0.0
    %1898 = vmatpush1.msra.mxu0 %v1881
    %1899 = vmatprep.subr.mxu0 0.0
    %1900 = vmatpush1.msra.mxu0 %v1882
    %1901 = vmatprep.subr.mxu0 0.0
    %1902 = vmatpush1.msra.mxu0 %v1883
    %1903 = vmatprep.subr.mxu0 0.0
    %1904 = vmatpush1.msra.mxu0 %v1884
    %1905 = vmatprep.subr.mxu0 0.0
    %1906 = vmatpush1.msra.mxu0 0.0
    %1907 = vmatprep.subr.mxu0 0.0
    %1908 = vmatpush1.msra.mxu0 0.0
    %1909 = vmatprep.subr.mxu0 0.0
    %1910 = vmatpush1.msra.mxu0 0.0
    %1911 = vmatprep.subr.mxu0 0.0
    %1912 = vmatpush1.msra.mxu0 0.0
    %1913 = vmatprep.subr.mxu0 0.0
    %1914 = vmatpush1.msra.mxu0 0.0
    %1915 = vmatprep.subr.mxu0 0.0
    %1916 = vmatpush1.msra.mxu0 0.0
    %1917 = vmatprep.subr.mxu0 0.0
    %1918 = vmatpush1.msra.mxu0 0.0
    %1919 = vmatprep.subr.mxu0 0.0
    %1920 = vmatpush1.msra.mxu0 0.0
    %1921 = vmatprep.subr.mxu0 0.0
    %1922 = vmatpush1.msra.mxu0 0.0
    %1923 = vmatprep.subr.mxu0 0.0
    %1924 = vmatpush1.msra.mxu0 0.0
    %1925 = vmatprep.subr.mxu0 0.0
    %1926 = vmatpush1.msra.mxu0 0.0
    %1927 = vmatprep.subr.mxu0 0.0
    %1928 = vmatpush1.msra.mxu0 0.0
    %1929 = vmatprep.subr.mxu0 0.0
    %1930 = vmatpush1.msra.mxu0 0.0
    %1931 = vmatprep.subr.mxu0 0.0
    %1932 = vmatpush1.msra.mxu0 0.0
    %1933 = vmatprep.subr.mxu0 0.0
    %1934 = vmatpush1.msra.mxu0 0.0
    %1935 = vmatprep.subr.mxu0 0.0
    %1936 = vmatpush1.msra.mxu0 0.0
    %1937 = vmatprep.subr.mxu0 0.0
    %1938 = vmatpush1.msra.mxu0 0.0
    %1939 = vmatprep.subr.mxu0 0.0
    %1940 = vmatpush1.msra.mxu0 0.0
    %1941 = vmatprep.subr.mxu0 0.0
    %1942 = vmatpush1.msra.mxu0 0.0
    %1943 = vmatprep.subr.mxu0 0.0
    %1944 = vmatpush1.msra.mxu0 0.0
    %1945 = vmatprep.subr.mxu0 0.0
    %1946 = vmatpush1.msra.mxu0 0.0
    %1947 = vmatprep.subr.mxu0 0.0
    %1948 = vmatpush1.msra.mxu0 0.0
    %1949 = vmatprep.subr.mxu0 0.0
    %1950 = vmatpush1.msra.mxu0 0.0
    %1951 = vmatprep.subr.mxu0 0.0
    %1952 = vmatpush1.msra.mxu0 0.0
    %1953 = vmatprep.subr.mxu0 0.0
    %1954 = vmatpush1.msra.mxu0 0.0
    %1955 = vmatprep.subr.mxu0 0.0
    %1956 = vmatpush1.msra.mxu0 0.0
    %1957 = vmatprep.subr.mxu0 0.0
    %1958 = vmatpush1.msra.mxu0 0.0
    %1959 = vmatprep.mubr.f32.mxu0 0.0
    %1960 = vmatmul.mubr.f32.gmra.mrb[0].mxu0 %v1893
    %v1961 = vpop.f32.mrb[0].mxu0
    %v1962 = vadd.f32 %v1890, %v1961
    %v1963 = vpop.f32.mrb[0].mxu0
    %1964 = vdwg.mxu0
    %v1965 = vxor.u32 %v1962, 2147483648
    %v1966 = vmul.f32 %v1965, 1.442695
    %v1967 = vpow.pop %v1966
    %v1968 = vadd.f32 %v1967, 1.0
    %v1969 = vrcp.pop %v1968
    %v1970 = vmul.f32 1.0, %v1969
    %1971 = vst.msk [vmem:[#allocation7] sm:$0xff] %vm908, %v1970
    %1972 = vst.msk [vmem:[#allocation4] sm:$0xff] %vm1265, %v809
    %1973 = vst.msk [vmem:[#allocation6] sm:$0xff] %vm1265, %v891
    %1974 = vst.msk [vmem:[#allocation9] sm:$0xff] %vm1265, %v1162
    %1975 = vst.msk [vmem:[#allocation10] sm:$0xff] %vm1265, %v1246
    %1976 = vst.msk [vmem:[#allocation12] sm:$0xff] %vm1437, %v1426
    // Predicated region
    $region158: #{gcn_vae_forward.3} parent=1 // pred_check
      _
    $region159: #{gcn_vae_forward.3} parent=1 // pred_check_branch
      %1978 = sbr.rel (0) target = $region161
    $region160: #{gcn_vae_forward.3} parent=1 // pred_region
      %s1980 = ssub.s32 128, 128
      %1981 = vsyncadd [#allocation3], %s1980
      %s1983 = sshll.u32 [#allocation2], 4
      %s1984 = int_to_ptr.vmem [resolvable:$true] %s1983
      %1986 = dma.vmem_to_hbm [thread:$0]  %s1984, 128, %s79, [#allocation3]
    $region161: #{gcn_vae_forward.3} parent=1 // pred_fallthru
      _
    // Predicated region
    $region162: #{gcn_vae_forward.3} parent=1 // pred_check
      _
    $region163: #{gcn_vae_forward.3} parent=1 // pred_check_branch
      %1988 = sbr.rel (0) target = $region165
    $region164: #{gcn_vae_forward.3} parent=1 // pred_region
      %s1990 = ssub.s32 128, 128
      %1991 = vsyncadd [#allocation5], %s1990
      %s1993 = sshll.u32 [#allocation4], 4
      %s1994 = int_to_ptr.vmem [resolvable:$true] %s1993
      %1996 = dma.vmem_to_hbm [thread:$0]  %s1994, 128, %s81, [#allocation5]
    $region165: #{gcn_vae_forward.3} parent=1 // pred_fallthru
      _
    // Predicated region
    $region166: #{gcn_vae_forward.3} parent=1 // pred_check
      _
    $region167: #{gcn_vae_forward.3} parent=1 // pred_check_branch
      %1998 = sbr.rel (0) target = $region169
    $region168: #{gcn_vae_forward.3} parent=1 // pred_region
      %s2000 = ssub.s32 128, 128
      %2001 = vsyncadd [#allocation5], %s2000
      %s2003 = sshll.u32 [#allocation6], 4
      %s2004 = int_to_ptr.vmem [resolvable:$true] %s2003
      %2006 = dma.vmem_to_hbm [thread:$0]  %s2004, 128, %s83, [#allocation5]
    $region169: #{gcn_vae_forward.3} parent=1 // pred_fallthru
      _
    // Predicated region
    $region170: #{gcn_vae_forward.3} parent=1 // pred_check
      _
    $region171: #{gcn_vae_forward.3} parent=1 // pred_check_branch
      %2008 = sbr.rel (0) target = $region173
    $region172: #{gcn_vae_forward.3} parent=1 // pred_region
      %s2010 = ssub.s32 128, 128
      %2011 = vsyncadd [#allocation8], %s2010
      %s2013 = sshll.u32 [#allocation7], 4
      %s2014 = int_to_ptr.vmem [resolvable:$true] %s2013
      %2016 = dma.vmem_to_hbm [thread:$0]  %s2014, 128, %s85, [#allocation8]
    $region173: #{gcn_vae_forward.3} parent=1 // pred_fallthru
      _
    // Predicated region
    $region174: #{gcn_vae_forward.3} parent=1 // pred_check
      _
    $region175: #{gcn_vae_forward.3} parent=1 // pred_check_branch
      %2018 = sbr.rel (0) target = $region177
    $region176: #{gcn_vae_forward.3} parent=1 // pred_region
      %s2020 = ssub.s32 128, 128
      %2021 = vsyncadd [#allocation8], %s2020
      %s2023 = sshll.u32 [#allocation9], 4
      %s2024 = int_to_ptr.vmem [resolvable:$true] %s2023
      %2026 = dma.vmem_to_hbm [thread:$0]  %s2024, 128, %s87, [#allocation8]
    $region177: #{gcn_vae_forward.3} parent=1 // pred_fallthru
      _
    // Predicated region
    $region178: #{gcn_vae_forward.3} parent=1 // pred_check
      _
    $region179: #{gcn_vae_forward.3} parent=1 // pred_check_branch
      %2028 = sbr.rel (0) target = $region181
    $region180: #{gcn_vae_forward.3} parent=1 // pred_region
      %s2030 = ssub.s32 128, 128
      %2031 = vsyncadd [#allocation11], %s2030
      %s2033 = sshll.u32 [#allocation10], 4
      %s2034 = int_to_ptr.vmem [resolvable:$true] %s2033
      %2036 = dma.vmem_to_hbm [thread:$0]  %s2034, 128, %s89, [#allocation11]
    $region181: #{gcn_vae_forward.3} parent=1 // pred_fallthru
      _
    // Predicated region
    $region182: #{gcn_vae_forward.3} parent=1 // pred_check
      _
    $region183: #{gcn_vae_forward.3} parent=1 // pred_check_branch
      %2038 = sbr.rel (0) target = $region185
    $region184: #{gcn_vae_forward.3} parent=1 // pred_region
      %s2040 = ssub.s32 128, 128
      %2041 = vsyncadd [#allocation11], %s2040
      %s2043 = sshll.u32 [#allocation12], 4
      %s2044 = int_to_ptr.vmem [resolvable:$true] %s2043
      %2046 = dma.vmem_to_hbm [thread:$0]  %s2044, 128, %s91, [#allocation11]
    $region185: #{gcn_vae_forward.3} parent=1 // pred_fallthru
      _
    // Predicated region
    $region186: #{gcn_vae_forward.3} parent=1 // pred_check
      _
    $region187: #{gcn_vae_forward.3} parent=1 // pred_check_branch
      %2048 = sbr.rel (0) target = $region189
    $region188: #{gcn_vae_forward.3} parent=1 // pred_region
      %2049 = dma.done [#allocation3], 128
    $region189: #{gcn_vae_forward.3} parent=1 // pred_fallthru
      _
    // Predicated region
    $region190: #{gcn_vae_forward.3} parent=1 // pred_check
      _
    $region191: #{gcn_vae_forward.3} parent=1 // pred_check_branch
      %2051 = sbr.rel (0) target = $region193
    $region192: #{gcn_vae_forward.3} parent=1 // pred_region
      %2052 = dma.done [#allocation5], 128
    $region193: #{gcn_vae_forward.3} parent=1 // pred_fallthru
      _
    // Predicated region
    $region194: #{gcn_vae_forward.3} parent=1 // pred_check
      _
    $region195: #{gcn_vae_forward.3} parent=1 // pred_check_branch
      %2054 = sbr.rel (0) target = $region197
    $region196: #{gcn_vae_forward.3} parent=1 // pred_region
      %2055 = dma.done [#allocation5], 128
    $region197: #{gcn_vae_forward.3} parent=1 // pred_fallthru
      _
    // Predicated region
    $region198: #{gcn_vae_forward.3} parent=1 // pred_check
      _
    $region199: #{gcn_vae_forward.3} parent=1 // pred_check_branch
      %2057 = sbr.rel (0) target = $region201
    $region200: #{gcn_vae_forward.3} parent=1 // pred_region
      %2058 = dma.done [#allocation8], 128
    $region201: #{gcn_vae_forward.3} parent=1 // pred_fallthru
      _
    // Predicated region
    $region202: #{gcn_vae_forward.3} parent=1 // pred_check
      _
    $region203: #{gcn_vae_forward.3} parent=1 // pred_check_branch
      %2060 = sbr.rel (0) target = $region205
    $region204: #{gcn_vae_forward.3} parent=1 // pred_region
      %2061 = dma.done [#allocation8], 128
    $region205: #{gcn_vae_forward.3} parent=1 // pred_fallthru
      _
    // Predicated region
    $region206: #{gcn_vae_forward.3} parent=1 // pred_check
      _
    $region207: #{gcn_vae_forward.3} parent=1 // pred_check_branch
      %2063 = sbr.rel (0) target = $region209
    $region208: #{gcn_vae_forward.3} parent=1 // pred_region
      %2064 = dma.done [#allocation11], 128
    $region209: #{gcn_vae_forward.3} parent=1 // pred_fallthru
      _
    // Predicated region
    $region210: #{gcn_vae_forward.3} parent=1 // pred_check
      _
    $region211: #{gcn_vae_forward.3} parent=1 // pred_check_branch
      %2066 = sbr.rel (0) target = $region213
    $region212: #{gcn_vae_forward.3} parent=1 // pred_region
      %2067 = dma.done [#allocation11], 128
    $region213: #{gcn_vae_forward.3} parent=1 // pred_fallthru
      _
    %2068 = vsyncpa [#allocation3], 1
    %2069 = vsyncpa [#allocation5], 1
    %2070 = vsyncpa [#allocation8], 1
    %2071 = vsyncpa [#allocation11], 1

</llo_original>
